<compile_context>
chip_gen: v6e
topology: v6e:2x2x1
jax: 0.10.0
libtpu: 0.0.40
codegen_flags: <defaults>
</compile_context>

<pallas_src>
import math
from functools import partial

import jax
import jax.numpy as jnp
from jax.experimental import pallas as pl
from jax.experimental.pallas import tpu as pltpu


# ----------------------------- in-kernel math helpers ----------------------

def _erf(z):
    # Abramowitz & Stegun 7.1.26, |abs err| <= 1.5e-7 (exp runs on the EUP).
    # TODO(synk): not bit-exact vs torch.nn.GELU's erf, but far inside f32 tol.
    p = 0.3275911
    a1, a2, a3, a4, a5 = (0.254829592, -0.284496736, 1.421413741,
                          -1.453152027, 1.061405429)
    s = jnp.where(z >= 0.0, 1.0, -1.0)
    az = jnp.abs(z)
    t = 1.0 / (1.0 + p * az)
    poly = t * (a1 + t * (a2 + t * (a3 + t * (a4 + t * a5))))
    return s * (1.0 - poly * jnp.exp(-az * az))


def _gelu(x):
    return 0.5 * x * (1.0 + _erf(x * (1.0 / math.sqrt(2.0))))


def _layernorm(x, g, b, eps=1e-5):
    mu = jnp.mean(x, axis=-1, keepdims=True)
    var = jnp.mean(jnp.square(x - mu), axis=-1, keepdims=True)
    return (x - mu) * jax.lax.rsqrt(var + eps) * g + b


# ----------------------------- fused transformer kernel --------------------

def _transformer_kernel(x_ref, wqkv_ref, bqkv_ref, wo_ref, bo_ref,
                        ln1g_ref, ln1b_ref, w1_ref, b1_ref, w2_ref, b2_ref,
                        ln2g_ref, ln2b_ref, o_ref, *, heads, dim_head):
    """One grid step = one transformer block applied to one batch element.

    grid = (B, depth); the output block index only depends on the batch axis,
    so o_ref stays resident in VMEM across all `depth` steps and serves as the
    running activation (S, D)."""
    layer = pl.program_id(1)

    @pl.when(layer == 0)
    def _():
        o_ref[...] = x_ref[...]          # load the input tokens once per batch

    x = o_ref[...].astype(jnp.float32)   # (S, D) activation, VMEM-resident

    inner = heads * dim_head
    scale = 1.0 / math.sqrt(dim_head)    # query_size == dim_head in DotAttention

    # ---- LSA: fused Q|K|V projection (single MXU pass, lane-dense output) --
    qkv = (jnp.dot(x, wqkv_ref[...], preferred_element_type=jnp.float32)
           + bqkv_ref[...])              # (S, 3*inner)

    # ---- per-head attention, heads indexed by static lane slices -----------
    head_outs = []
    for h in range(heads):
        q = qkv[:, h * dim_head:(h + 1) * dim_head]                    # (S, Dh)
        k = qkv[:, inner + h * dim_head:inner + (h + 1) * dim_head]    # (S, Dh)
        v = qkv[:, 2 * inner + h * dim_head:2 * inner + (h + 1) * dim_head]
        s = jax.lax.dot_general(q, k, (((1,), (1,)), ((), ())),
                                preferred_element_type=jnp.float32) * scale
        s = s - jnp.max(s, axis=-1, keepdims=True)
        p = jnp.exp(s)
        p = p * pl.reciprocal(jnp.sum(p, axis=-1, keepdims=True), approx=True)
        head_outs.append(jnp.dot(p, v, preferred_element_type=jnp.float32))
    attn = jnp.concatenate(head_outs, axis=-1)                         # (S, inner)

    # ---- output projection + AddNorm #1 ------------------------------------
    proj = (jnp.dot(attn, wo_ref[...], preferred_element_type=jnp.float32)
            + bo_ref[...])
    x = x + _layernorm(proj, ln1g_ref[...], ln1b_ref[...])

    # ---- FeedForward (Linear -> GELU -> Linear) + AddNorm #2 ----------------
    h1 = jnp.dot(x, w1_ref[...], preferred_element_type=jnp.float32) + b1_ref[...]
    h1 = _gelu(h1)
    ffn = jnp.dot(h1, w2_ref[...], preferred_element_type=jnp.float32) + b2_ref[...]
    x = x + _layernorm(ffn, ln2g_ref[...], ln2b_ref[...])

    o_ref[...] = x.astype(o_ref.dtype)


def transformer_forward(x, params, *, heads, dim_head):
    """x: (B, S, dim); params: per-block weights stacked on a leading depth axis."""
    B, S, D = x.shape
    depth = params["wqkv"].shape[0]
    inner = heads * dim_head
    mlp_dim = params["w1"].shape[-1]

    tok_spec = pl.BlockSpec((None, S, D), lambda b, l: (b, 0, 0))

    def wspec(r, c):
        # per-layer weight slab (depth axis squeezed away inside the kernel)
        return pl.BlockSpec((None, r, c), lambda b, l: (l, 0, 0))

    kernel = partial(_transformer_kernel, heads=heads, dim_head=dim_head)
    # TODO(synk): for scaled-up dims cast matmul operands to bf16 (f32 accum)
    # and tile the matmuls over a K/N grid; at dim=32/mlp=64 the whole per-block
    # working set (<60 KB) is trivially VMEM-resident on v5e/v6e/v7x.
    return pl.pallas_call(
        kernel,
        out_shape=jax.ShapeDtypeStruct((B, S, D), x.dtype),
        grid=(B, depth),
        in_specs=[
            tok_spec,                                   # x
            wspec(D, 3 * inner), wspec(1, 3 * inner),   # fused Wqkv, bqkv
            wspec(inner, D),     wspec(1, D),           # Wo, bo
            wspec(1, D),         wspec(1, D),           # ln1 gamma, beta
            wspec(D, mlp_dim),   wspec(1, mlp_dim),     # W1, b1
            wspec(mlp_dim, D),   wspec(1, D),           # W2, b2
            wspec(1, D),         wspec(1, D),           # ln2 gamma, beta
        ],
        out_specs=tok_spec,
        compiler_params=pltpu.CompilerParams(
            dimension_semantics=("parallel", "arbitrary")),
    )(x, params["wqkv"], params["bqkv"], params["wo"], params["bo"],
      params["ln1_g"], params["ln1_b"], params["w1"], params["b1"],
      params["w2"], params["b2"], params["ln2_g"], params["ln2_b"])


# ----------------------------- plain-JAX reference -------------------------

def transformer_reference(x, params, *, heads, dim_head):
    B, S, D = x.shape
    depth = params["wqkv"].shape[0]
    inner = heads * dim_head
    scale = 1.0 / math.sqrt(dim_head)

    def ln(y, g, b):
        mu = jnp.mean(y, axis=-1, keepdims=True)
        var = jnp.mean(jnp.square(y - mu), axis=-1, keepdims=True)
        return (y - mu) / jnp.sqrt(var + 1e-5) * g + b

    for l in range(depth):
        qkv = x @ params["wqkv"][l] + params["bqkv"][l]
        q, k, v = jnp.split(qkv, 3, axis=-1)
        sh = lambda t: t.reshape(B, S, heads, dim_head).transpose(0, 2, 1, 3)
        q, k, v = sh(q), sh(k), sh(v)
        s = jnp.einsum("bhqd,bhkd->bhqk", q, k) * scale
        p = jax.nn.softmax(s, axis=-1)
        o = jnp.einsum("bhqk,bhkd->bhqd", p, v)
        o = o.transpose(0, 2, 1, 3).reshape(B, S, inner)
        attn = o @ params["wo"][l] + params["bo"][l]
        x = x + ln(attn, params["ln1_g"][l], params["ln1_b"][l])
        h = jax.nn.gelu(x @ params["w1"][l] + params["b1"][l], approximate=False)
        ffn = h @ params["w2"][l] + params["b2"][l]
        x = x + ln(ffn, params["ln2_g"][l], params["ln2_b"][l])
    return x


# ----------------------------- parameter init ------------------------------

def init_params(key, *, dim, depth, heads, dim_head, mlp_dim):
    inner = heads * dim_head

    def linear_init(k, fan_in, fan_out):
        k1, k2 = jax.random.split(k)
        bound = 1.0 / math.sqrt(fan_in)
        w = jax.random.uniform(k1, (fan_in, fan_out), jnp.float32, -bound, bound)
        b = jax.random.uniform(k2, (1, fan_out), jnp.float32, -bound, bound)
        return w, b

    names = ["wqkv", "bqkv", "wo", "bo", "w1", "b1", "w2", "b2",
             "ln1_g", "ln1_b", "ln2_g", "ln2_b"]
    acc = {n: [] for n in names}
    keys = jax.random.split(key, depth)
    for d in range(depth):
        ks = jax.random.split(keys[d], 6)
        wq, bq = linear_init(ks[0], dim, inner)
        wk, bk = linear_init(ks[1], dim, inner)
        wv, bv = linear_init(ks[2], dim, inner)
        acc["wqkv"].append(jnp.concatenate([wq, wk, wv], axis=1))
        acc["bqkv"].append(jnp.concatenate([bq, bk, bv], axis=1))
        wo, bo = linear_init(ks[3], inner, dim)
        acc["wo"].append(wo); acc["bo"].append(bo)
        w1, b1 = linear_init(ks[4], dim, mlp_dim)
        acc["w1"].append(w1); acc["b1"].append(b1)
        w2, b2 = linear_init(ks[5], mlp_dim, dim)
        acc["w2"].append(w2); acc["b2"].append(b2)
        acc["ln1_g"].append(jnp.ones((1, dim), jnp.float32))
        acc["ln1_b"].append(jnp.zeros((1, dim), jnp.float32))
        acc["ln2_g"].append(jnp.ones((1, dim), jnp.float32))
        acc["ln2_b"].append(jnp.zeros((1, dim), jnp.float32))
    return {n: jnp.stack(v) for n, v in acc.items()}


# ----------------------------- main ----------------------------------------

if __name__ == "__main__":
    dim, depth, heads, dim_head, mlp_dim = 32, 2, 2, 16, 64
    batch, seq = 2, 16

    key = jax.random.PRNGKey(0)
    kp, kx = jax.random.split(key)
    params = init_params(kp, dim=dim, depth=depth, heads=heads,
                         dim_head=dim_head, mlp_dim=mlp_dim)
    x = jax.random.normal(kx, (batch, seq, dim), jnp.float32)

    fwd = jax.jit(partial(transformer_forward, heads=heads, dim_head=dim_head))
    out = fwd(x, params)
    jax.block_until_ready(out)

    assert out.shape == (batch, seq, dim)
    assert bool(jnp.all(jnp.isfinite(out)))

    ref = transformer_reference(x, params, heads=heads, dim_head=dim_head)
    assert bool(jnp.allclose(out, ref, rtol=2e-2, atol=2e-2)), \
        float(jnp.max(jnp.abs(out - ref)))

    print("KERNEL_OK")
</pallas_src>

<mosaic_0001>
module attributes {stable_mosaic.version = 11 : i64} {
  func.func @_transformer_kernel(%arg0: i32, %arg1: i32, %arg2: memref<1x16x32xf32, #tpu.memory_space<vmem>>, %arg3: memref<1x32x96xf32, #tpu.memory_space<vmem>>, %arg4: memref<1x1x96xf32, #tpu.memory_space<vmem>>, %arg5: memref<1x32x32xf32, #tpu.memory_space<vmem>>, %arg6: memref<1x1x32xf32, #tpu.memory_space<vmem>>, %arg7: memref<1x1x32xf32, #tpu.memory_space<vmem>>, %arg8: memref<1x1x32xf32, #tpu.memory_space<vmem>>, %arg9: memref<1x32x64xf32, #tpu.memory_space<vmem>>, %arg10: memref<1x1x64xf32, #tpu.memory_space<vmem>>, %arg11: memref<1x64x32xf32, #tpu.memory_space<vmem>>, %arg12: memref<1x1x32xf32, #tpu.memory_space<vmem>>, %arg13: memref<1x1x32xf32, #tpu.memory_space<vmem>>, %arg14: memref<1x1x32xf32, #tpu.memory_space<vmem>>, %arg15: memref<1x16x32xf32, #tpu.memory_space<vmem>>) attributes {dimension_semantics = [#tpu.dimension_semantics<parallel>, #tpu.dimension_semantics<arbitrary>], iteration_bounds = array<i64: 2, 2>, scalar_prefetch = 0 : i64, scratch_operands = 0 : i64, tpu.core_type = #tpu.core_type<tc>, window_params = [{transform_indices = @transform_0, window_bounds = array<i64: 1, 16, 32>}, {transform_indices = @transform_1, window_bounds = array<i64: 1, 32, 96>}, {transform_indices = @transform_2, window_bounds = array<i64: 1, 1, 96>}, {transform_indices = @transform_3, window_bounds = array<i64: 1, 32, 32>}, {transform_indices = @transform_4, window_bounds = array<i64: 1, 1, 32>}, {transform_indices = @transform_5, window_bounds = array<i64: 1, 1, 32>}, {transform_indices = @transform_6, window_bounds = array<i64: 1, 1, 32>}, {transform_indices = @transform_7, window_bounds = array<i64: 1, 32, 64>}, {transform_indices = @transform_8, window_bounds = array<i64: 1, 1, 64>}, {transform_indices = @transform_9, window_bounds = array<i64: 1, 64, 32>}, {transform_indices = @transform_10, window_bounds = array<i64: 1, 1, 32>}, {transform_indices = @transform_11, window_bounds = array<i64: 1, 1, 32>}, {transform_indices = @transform_12, window_bounds = array<i64: 1, 1, 32>}, {transform_indices = @transform_13, window_bounds = array<i64: 1, 16, 32>}]} {
    %c0_i32 = arith.constant 0 : i32
    %0 = arith.cmpi eq, %arg1, %c0_i32 : i32
    %1 = arith.extui %0 : i1 to i32
    %c0_i32_0 = arith.constant 0 : i32
    %2 = arith.cmpi ne, %1, %c0_i32_0 : i32
    scf.if %2 {
      %c0_81 = arith.constant 0 : index
      %c0_82 = arith.constant 0 : index
      %c0_83 = arith.constant 0 : index
      %166 = vector.load %arg2[%c0_81, %c0_82, %c0_83] : memref<1x16x32xf32, #tpu.memory_space<vmem>>, vector<1x16x32xf32>
      %167 = vector.shape_cast %166 : vector<1x16x32xf32> to vector<16x32xf32>
      %c0_84 = arith.constant 0 : index
      %c0_85 = arith.constant 0 : index
      %c0_86 = arith.constant 0 : index
      %168 = vector.load %arg15[%c0_84, %c0_85, %c0_86] : memref<1x16x32xf32, #tpu.memory_space<vmem>>, vector<1x16x32xf32>
      %169 = vector.shape_cast %168 : vector<1x16x32xf32> to vector<16x32xf32>
      %170 = vector.shape_cast %167 : vector<16x32xf32> to vector<1x16x32xf32>
      tpu.vector_store %arg15[%c0_84, %c0_85, %c0_86], %170 {strides = array<i32>} : memref<1x16x32xf32, #tpu.memory_space<vmem>>, vector<1x16x32xf32>,
    } else {
    }
    %c0 = arith.constant 0 : index
    %c0_1 = arith.constant 0 : index
    %c0_2 = arith.constant 0 : index
    %3 = vector.load %arg15[%c0, %c0_1, %c0_2] : memref<1x16x32xf32, #tpu.memory_space<vmem>>, vector<1x16x32xf32>
    %4 = vector.shape_cast %3 : vector<1x16x32xf32> to vector<16x32xf32>
    %c0_3 = arith.constant 0 : index
    %c0_4 = arith.constant 0 : index
    %c0_5 = arith.constant 0 : index
    %5 = vector.load %arg3[%c0_3, %c0_4, %c0_5] : memref<1x32x96xf32, #tpu.memory_space<vmem>>, vector<1x32x96xf32>
    %6 = vector.shape_cast %5 : vector<1x32x96xf32> to vector<32x96xf32>
    %cst = arith.constant dense<0.000000e+00> : vector<16x96xf32>
    %7 = tpu.matmul %4, %6, %cst {dimension_numbers = #tpu.dot_dimension_numbers<[1], [0], [0], [1], [0, 0, 1, 1], [], []>} : vector<16x32xf32>, vector<32x96xf32>, vector<16x96xf32> -> vector<16x96xf32>
    %c0_6 = arith.constant 0 : index
    %c0_7 = arith.constant 0 : index
    %c0_8 = arith.constant 0 : index
    %8 = vector.load %arg4[%c0_6, %c0_7, %c0_8] : memref<1x1x96xf32, #tpu.memory_space<vmem>>, vector<1x1x96xf32>
    %9 = vector.shape_cast %8 : vector<1x1x96xf32> to vector<1x96xf32>
    %10 = vector.broadcast %9 : vector<1x96xf32> to vector<16x96xf32>
    %11 = arith.addf %7, %10 : vector<16x96xf32>
    %12 = vector.extract_strided_slice %11 {offsets = [0, 0], sizes = [16, 16], strides = [1, 1]} : vector<16x96xf32> to vector<16x16xf32>
    %13 = vector.extract_strided_slice %11 {offsets = [0, 32], sizes = [16, 16], strides = [1, 1]} : vector<16x96xf32> to vector<16x16xf32>
    %14 = vector.extract_strided_slice %11 {offsets = [0, 64], sizes = [16, 16], strides = [1, 1]} : vector<16x96xf32> to vector<16x16xf32>
    %cst_9 = arith.constant dense<0.000000e+00> : vector<16x16xf32>
    %15 = tpu.matmul %12, %13, %cst_9 {dimension_numbers = #tpu.dot_dimension_numbers<[1], [1], [0], [0], [0, 0, 1, 0], [], []>} : vector<16x16xf32>, vector<16x16xf32>, vector<16x16xf32> -> vector<16x16xf32>
    %cst_10 = arith.constant 2.500000e-01 : f32
    %16 = vector.broadcast %cst_10 : f32 to vector<16x16xf32>
    %17 = arith.mulf %15, %16 : vector<16x16xf32>
    %cst_11 = arith.constant dense<0xFF800000> : vector<16xf32>
    %18 = vector.multi_reduction <maximumf>, %17, %cst_11 [1] : vector<16x16xf32> to vector<16xf32>
    %19 = vector.shape_cast %18 : vector<16xf32> to vector<16x1xf32>
    %20 = vector.broadcast %19 : vector<16x1xf32> to vector<16x16xf32>
    %21 = arith.subf %17, %20 : vector<16x16xf32>
    %22 = math.exp %21 : vector<16x16xf32>
    %cst_12 = arith.constant dense<0.000000e+00> : vector<16xf32>
    %23 = vector.multi_reduction <add>, %22, %cst_12 [1] : vector<16x16xf32> to vector<16xf32>
    %24 = vector.shape_cast %23 : vector<16xf32> to vector<16x1xf32>
    %25 = tpu.reciprocal %24 {approx = true} : vector<16x1xf32> -> vector<16x1xf32>
    %26 = vector.broadcast %25 : vector<16x1xf32> to vector<16x16xf32>
    %27 = arith.mulf %22, %26 : vector<16x16xf32>
    %cst_13 = arith.constant dense<0.000000e+00> : vector<16x16xf32>
    %28 = tpu.matmul %27, %14, %cst_13 {dimension_numbers = #tpu.dot_dimension_numbers<[1], [0], [0], [1], [0, 0, 1, 1], [], []>} : vector<16x16xf32>, vector<16x16xf32>, vector<16x16xf32> -> vector<16x16xf32>
    %29 = vector.extract_strided_slice %11 {offsets = [0, 16], sizes = [16, 16], strides = [1, 1]} : vector<16x96xf32> to vector<16x16xf32>
    %30 = vector.extract_strided_slice %11 {offsets = [0, 48], sizes = [16, 16], strides = [1, 1]} : vector<16x96xf32> to vector<16x16xf32>
    %31 = vector.extract_strided_slice %11 {offsets = [0, 80], sizes = [16, 16], strides = [1, 1]} : vector<16x96xf32> to vector<16x16xf32>
    %cst_14 = arith.constant dense<0.000000e+00> : vector<16x16xf32>
    %32 = tpu.matmul %29, %30, %cst_14 {dimension_numbers = #tpu.dot_dimension_numbers<[1], [1], [0], [0], [0, 0, 1, 0], [], []>} : vector<16x16xf32>, vector<16x16xf32>, vector<16x16xf32> -> vector<16x16xf32>
    %cst_15 = arith.constant 2.500000e-01 : f32
    %33 = vector.broadcast %cst_15 : f32 to vector<16x16xf32>
    %34 = arith.mulf %32, %33 : vector<16x16xf32>
    %cst_16 = arith.constant dense<0xFF800000> : vector<16xf32>
    %35 = vector.multi_reduction <maximumf>, %34, %cst_16 [1] : vector<16x16xf32> to vector<16xf32>
    %36 = vector.shape_cast %35 : vector<16xf32> to vector<16x1xf32>
    %37 = vector.broadcast %36 : vector<16x1xf32> to vector<16x16xf32>
    %38 = arith.subf %34, %37 : vector<16x16xf32>
    %39 = math.exp %38 : vector<16x16xf32>
    %cst_17 = arith.constant dense<0.000000e+00> : vector<16xf32>
    %40 = vector.multi_reduction <add>, %39, %cst_17 [1] : vector<16x16xf32> to vector<16xf32>
    %41 = vector.shape_cast %40 : vector<16xf32> to vector<16x1xf32>
    %42 = tpu.reciprocal %41 {approx = true} : vector<16x1xf32> -> vector<16x1xf32>
    %43 = vector.broadcast %42 : vector<16x1xf32> to vector<16x16xf32>
    %44 = arith.mulf %39, %43 : vector<16x16xf32>
    %cst_18 = arith.constant dense<0.000000e+00> : vector<16x16xf32>
    %45 = tpu.matmul %44, %31, %cst_18 {dimension_numbers = #tpu.dot_dimension_numbers<[1], [0], [0], [1], [0, 0, 1, 1], [], []>} : vector<16x16xf32>, vector<16x16xf32>, vector<16x16xf32> -> vector<16x16xf32>
    %46 = tpu.concatenate %28, %45 in 1 : vector<16x16xf32>, vector<16x16xf32> -> vector<16x32xf32>
    %c0_19 = arith.constant 0 : index
    %c0_20 = arith.constant 0 : index
    %c0_21 = arith.constant 0 : index
    %47 = vector.load %arg5[%c0_19, %c0_20, %c0_21] : memref<1x32x32xf32, #tpu.memory_space<vmem>>, vector<1x32x32xf32>
    %48 = vector.shape_cast %47 : vector<1x32x32xf32> to vector<32x32xf32>
    %cst_22 = arith.constant dense<0.000000e+00> : vector<16x32xf32>
    %49 = tpu.matmul %46, %48, %cst_22 {dimension_numbers = #tpu.dot_dimension_numbers<[1], [0], [0], [1], [0, 0, 1, 1], [], []>} : vector<16x32xf32>, vector<32x32xf32>, vector<16x32xf32> -> vector<16x32xf32>
    %c0_23 = arith.constant 0 : index
    %c0_24 = arith.constant 0 : index
    %c0_25 = arith.constant 0 : index
    %50 = vector.load %arg6[%c0_23, %c0_24, %c0_25] : memref<1x1x32xf32, #tpu.memory_space<vmem>>, vector<1x1x32xf32>
    %51 = vector.shape_cast %50 : vector<1x1x32xf32> to vector<1x32xf32>
    %52 = vector.broadcast %51 : vector<1x32xf32> to vector<16x32xf32>
    %53 = arith.addf %49, %52 : vector<16x32xf32>
    %c0_26 = arith.constant 0 : index
    %c0_27 = arith.constant 0 : index
    %c0_28 = arith.constant 0 : index
    %54 = vector.load %arg7[%c0_26, %c0_27, %c0_28] : memref<1x1x32xf32, #tpu.memory_space<vmem>>, vector<1x1x32xf32>
    %55 = vector.shape_cast %54 : vector<1x1x32xf32> to vector<1x32xf32>
    %c0_29 = arith.constant 0 : index
    %c0_30 = arith.constant 0 : index
    %c0_31 = arith.constant 0 : index
    %56 = vector.load %arg8[%c0_29, %c0_30, %c0_31] : memref<1x1x32xf32, #tpu.memory_space<vmem>>, vector<1x1x32xf32>
    %57 = vector.shape_cast %56 : vector<1x1x32xf32> to vector<1x32xf32>
    %cst_32 = arith.constant dense<0.000000e+00> : vector<16xf32>
    %58 = vector.multi_reduction <add>, %53, %cst_32 [1] : vector<16x32xf32> to vector<16xf32>
    %59 = vector.shape_cast %58 : vector<16xf32> to vector<16x1xf32>
    %cst_33 = arith.constant 3.200000e+01 : f32
    %60 = vector.broadcast %cst_33 : f32 to vector<16x1xf32>
    %61 = arith.divf %59, %60 : vector<16x1xf32>
    %62 = vector.broadcast %61 : vector<16x1xf32> to vector<16x32xf32>
    %63 = arith.subf %53, %62 : vector<16x32xf32>
    %64 = arith.mulf %63, %63 : vector<16x32xf32>
    %cst_34 = arith.constant dense<0.000000e+00> : vector<16xf32>
    %65 = vector.multi_reduction <add>, %64, %cst_34 [1] : vector<16x32xf32> to vector<16xf32>
    %66 = vector.shape_cast %65 : vector<16xf32> to vector<16x1xf32>
    %cst_35 = arith.constant 3.200000e+01 : f32
    %67 = vector.broadcast %cst_35 : f32 to vector<16x1xf32>
    %68 = arith.divf %66, %67 : vector<16x1xf32>
    %69 = vector.broadcast %61 : vector<16x1xf32> to vector<16x32xf32>
    %70 = arith.subf %53, %69 : vector<16x32xf32>
    %cst_36 = arith.constant 9.99999974E-6 : f32
    %71 = vector.broadcast %cst_36 : f32 to vector<16x1xf32>
    %72 = arith.addf %68, %71 : vector<16x1xf32>
    %73 = math.rsqrt %72 : vector<16x1xf32>
    %74 = vector.broadcast %73 : vector<16x1xf32> to vector<16x32xf32>
    %75 = arith.mulf %70, %74 : vector<16x32xf32>
    %76 = vector.broadcast %55 : vector<1x32xf32> to vector<16x32xf32>
    %77 = arith.mulf %75, %76 : vector<16x32xf32>
    %78 = vector.broadcast %57 : vector<1x32xf32> to vector<16x32xf32>
    %79 = arith.addf %77, %78 : vector<16x32xf32>
    %80 = arith.addf %4, %79 : vector<16x32xf32>
    %c0_37 = arith.constant 0 : index
    %c0_38 = arith.constant 0 : index
    %c0_39 = arith.constant 0 : index
    %81 = vector.load %arg9[%c0_37, %c0_38, %c0_39] : memref<1x32x64xf32, #tpu.memory_space<vmem>>, vector<1x32x64xf32>
    %82 = vector.shape_cast %81 : vector<1x32x64xf32> to vector<32x64xf32>
    %cst_40 = arith.constant dense<0.000000e+00> : vector<16x64xf32>
    %83 = tpu.matmul %80, %82, %cst_40 {dimension_numbers = #tpu.dot_dimension_numbers<[1], [0], [0], [1], [0, 0, 1, 1], [], []>} : vector<16x32xf32>, vector<32x64xf32>, vector<16x64xf32> -> vector<16x64xf32>
    %c0_41 = arith.constant 0 : index
    %c0_42 = arith.constant 0 : index
    %c0_43 = arith.constant 0 : index
    %84 = vector.load %arg10[%c0_41, %c0_42, %c0_43] : memref<1x1x64xf32, #tpu.memory_space<vmem>>, vector<1x1x64xf32>
    %85 = vector.shape_cast %84 : vector<1x1x64xf32> to vector<1x64xf32>
    %86 = vector.broadcast %85 : vector<1x64xf32> to vector<16x64xf32>
    %87 = arith.addf %83, %86 : vector<16x64xf32>
    %cst_44 = arith.constant 5.000000e-01 : f32
    %88 = vector.broadcast %cst_44 : f32 to vector<16x64xf32>
    %89 = arith.mulf %88, %87 : vector<16x64xf32>
    %cst_45 = arith.constant 0.707106769 : f32
    %90 = vector.broadcast %cst_45 : f32 to vector<16x64xf32>
    %91 = arith.mulf %87, %90 : vector<16x64xf32>
    %cst_46 = arith.constant 0.000000e+00 : f32
    %92 = vector.broadcast %cst_46 : f32 to vector<16x64xf32>
    %93 = arith.cmpf oge, %91, %92 : vector<16x64xf32>
    %cst_47 = arith.constant 1.000000e+00 : f32
    %cst_48 = arith.constant -1.000000e+00 : f32
    %94 = vector.broadcast %cst_47 : f32 to vector<16x64xf32>
    %95 = vector.broadcast %cst_48 : f32 to vector<16x64xf32>
    %96 = arith.select %93, %94, %95 : vector<16x64xi1>, vector<16x64xf32>
    %97 = math.absf %91 : vector<16x64xf32>
    %cst_49 = arith.constant 0.327591091 : f32
    %98 = vector.broadcast %cst_49 : f32 to vector<16x64xf32>
    %99 = arith.mulf %98, %97 : vector<16x64xf32>
    %cst_50 = arith.constant 1.000000e+00 : f32
    %100 = vector.broadcast %cst_50 : f32 to vector<16x64xf32>
    %101 = arith.addf %100, %99 : vector<16x64xf32>
    %cst_51 = arith.constant 1.000000e+00 : f32
    %102 = vector.broadcast %cst_51 : f32 to vector<16x64xf32>
    %103 = arith.divf %102, %101 : vector<16x64xf32>
    %cst_52 = arith.constant 1.06140542 : f32
    %104 = vector.broadcast %cst_52 : f32 to vector<16x64xf32>
    %105 = arith.mulf %103, %104 : vector<16x64xf32>
    %cst_53 = arith.constant -1.45315206 : f32
    %106 = vector.broadcast %cst_53 : f32 to vector<16x64xf32>
    %107 = arith.addf %106, %105 : vector<16x64xf32>
    %108 = arith.mulf %103, %107 : vector<16x64xf32>
    %cst_54 = arith.constant 1.42141378 : f32
    %109 = vector.broadcast %cst_54 : f32 to vector<16x64xf32>
    %110 = arith.addf %109, %108 : vector<16x64xf32>
    %111 = arith.mulf %103, %110 : vector<16x64xf32>
    %cst_55 = arith.constant -0.284496725 : f32
    %112 = vector.broadcast %cst_55 : f32 to vector<16x64xf32>
    %113 = arith.addf %112, %111 : vector<16x64xf32>
    %114 = arith.mulf %103, %113 : vector<16x64xf32>
    %cst_56 = arith.constant 0.254829586 : f32
    %115 = vector.broadcast %cst_56 : f32 to vector<16x64xf32>
    %116 = arith.addf %115, %114 : vector<16x64xf32>
    %117 = arith.mulf %103, %116 : vector<16x64xf32>
    %cst_57 = arith.constant 0.000000e+00 : f32
    %118 = vector.broadcast %cst_57 : f32 to vector<16x64xf32>
    %119 = arith.subf %118, %97 : vector<16x64xf32>
    %120 = arith.mulf %119, %97 : vector<16x64xf32>
    %121 = math.exp %120 : vector<16x64xf32>
    %122 = arith.mulf %117, %121 : vector<16x64xf32>
    %cst_58 = arith.constant 1.000000e+00 : f32
    %123 = vector.broadcast %cst_58 : f32 to vector<16x64xf32>
    %124 = arith.subf %123, %122 : vector<16x64xf32>
    %125 = arith.mulf %96, %124 : vector<16x64xf32>
    %cst_59 = arith.constant 1.000000e+00 : f32
    %126 = vector.broadcast %cst_59 : f32 to vector<16x64xf32>
    %127 = arith.addf %126, %125 : vector<16x64xf32>
    %128 = arith.mulf %89, %127 : vector<16x64xf32>
    %c0_60 = arith.constant 0 : index
    %c0_61 = arith.constant 0 : index
    %c0_62 = arith.constant 0 : index
    %129 = vector.load %arg11[%c0_60, %c0_61, %c0_62] : memref<1x64x32xf32, #tpu.memory_space<vmem>>, vector<1x64x32xf32>
    %130 = vector.shape_cast %129 : vector<1x64x32xf32> to vector<64x32xf32>
    %cst_63 = arith.constant dense<0.000000e+00> : vector<16x32xf32>
    %131 = tpu.matmul %128, %130, %cst_63 {dimension_numbers = #tpu.dot_dimension_numbers<[1], [0], [0], [1], [0, 0, 1, 1], [], []>} : vector<16x64xf32>, vector<64x32xf32>, vector<16x32xf32> -> vector<16x32xf32>
    %c0_64 = arith.constant 0 : index
    %c0_65 = arith.constant 0 : index
    %c0_66 = arith.constant 0 : index
    %132 = vector.load %arg12[%c0_64, %c0_65, %c0_66] : memref<1x1x32xf32, #tpu.memory_space<vmem>>, vector<1x1x32xf32>
    %133 = vector.shape_cast %132 : vector<1x1x32xf32> to vector<1x32xf32>
    %134 = vector.broadcast %133 : vector<1x32xf32> to vector<16x32xf32>
    %135 = arith.addf %131, %134 : vector<16x32xf32>
    %c0_67 = arith.constant 0 : index
    %c0_68 = arith.constant 0 : index
    %c0_69 = arith.constant 0 : index
    %136 = vector.load %arg13[%c0_67, %c0_68, %c0_69] : memref<1x1x32xf32, #tpu.memory_space<vmem>>, vector<1x1x32xf32>
    %137 = vector.shape_cast %136 : vector<1x1x32xf32> to vector<1x32xf32>
    %c0_70 = arith.constant 0 : index
    %c0_71 = arith.constant 0 : index
    %c0_72 = arith.constant 0 : index
    %138 = vector.load %arg14[%c0_70, %c0_71, %c0_72] : memref<1x1x32xf32, #tpu.memory_space<vmem>>, vector<1x1x32xf32>
    %139 = vector.shape_cast %138 : vector<1x1x32xf32> to vector<1x32xf32>
    %cst_73 = arith.constant dense<0.000000e+00> : vector<16xf32>
    %140 = vector.multi_reduction <add>, %135, %cst_73 [1] : vector<16x32xf32> to vector<16xf32>
    %141 = vector.shape_cast %140 : vector<16xf32> to vector<16x1xf32>
    %cst_74 = arith.constant 3.200000e+01 : f32
    %142 = vector.broadcast %cst_74 : f32 to vector<16x1xf32>
    %143 = arith.divf %141, %142 : vector<16x1xf32>
    %144 = vector.broadcast %143 : vector<16x1xf32> to vector<16x32xf32>
    %145 = arith.subf %135, %144 : vector<16x32xf32>
    %146 = arith.mulf %145, %145 : vector<16x32xf32>
    %cst_75 = arith.constant dense<0.000000e+00> : vector<16xf32>
    %147 = vector.multi_reduction <add>, %146, %cst_75 [1] : vector<16x32xf32> to vector<16xf32>
    %148 = vector.shape_cast %147 : vector<16xf32> to vector<16x1xf32>
    %cst_76 = arith.constant 3.200000e+01 : f32
    %149 = vector.broadcast %cst_76 : f32 to vector<16x1xf32>
    %150 = arith.divf %148, %149 : vector<16x1xf32>
    %151 = vector.broadcast %143 : vector<16x1xf32> to vector<16x32xf32>
    %152 = arith.subf %135, %151 : vector<16x32xf32>
    %cst_77 = arith.constant 9.99999974E-6 : f32
    %153 = vector.broadcast %cst_77 : f32 to vector<16x1xf32>
    %154 = arith.addf %150, %153 : vector<16x1xf32>
    %155 = math.rsqrt %154 : vector<16x1xf32>
    %156 = vector.broadcast %155 : vector<16x1xf32> to vector<16x32xf32>
    %157 = arith.mulf %152, %156 : vector<16x32xf32>
    %158 = vector.broadcast %137 : vector<1x32xf32> to vector<16x32xf32>
    %159 = arith.mulf %157, %158 : vector<16x32xf32>
    %160 = vector.broadcast %139 : vector<1x32xf32> to vector<16x32xf32>
    %161 = arith.addf %159, %160 : vector<16x32xf32>
    %162 = arith.addf %80, %161 : vector<16x32xf32>
    %c0_78 = arith.constant 0 : index
    %c0_79 = arith.constant 0 : index
    %c0_80 = arith.constant 0 : index
    %163 = vector.load %arg15[%c0_78, %c0_79, %c0_80] : memref<1x16x32xf32, #tpu.memory_space<vmem>>, vector<1x16x32xf32>
    %164 = vector.shape_cast %163 : vector<1x16x32xf32> to vector<16x32xf32>
    %165 = vector.shape_cast %162 : vector<16x32xf32> to vector<1x16x32xf32>
    tpu.vector_store %arg15[%c0_78, %c0_79, %c0_80], %165 {strides = array<i32>} : memref<1x16x32xf32, #tpu.memory_space<vmem>>, vector<1x16x32xf32>,
    return
  }
  func.func @transform_0(%arg0: i32, %arg1: i32) -> (i32, i32, i32) {
    %c0_i32 = arith.constant 0 : i32
    %c0_i32_0 = arith.constant 0 : i32
    %c0_i32_1 = arith.constant 0 : i32
    return %arg0, %c0_i32, %c0_i32_0 : i32, i32, i32
  }
  func.func @transform_1(%arg0: i32, %arg1: i32) -> (i32, i32, i32) {
    %c0_i32 = arith.constant 0 : i32
    %c0_i32_0 = arith.constant 0 : i32
    %c0_i32_1 = arith.constant 0 : i32
    return %arg1, %c0_i32, %c0_i32_0 : i32, i32, i32
  }
  func.func @transform_2(%arg0: i32, %arg1: i32) -> (i32, i32, i32) {
    %c0_i32 = arith.constant 0 : i32
    %c0_i32_0 = arith.constant 0 : i32
    %c0_i32_1 = arith.constant 0 : i32
    return %arg1, %c0_i32, %c0_i32_0 : i32, i32, i32
  }
  func.func @transform_3(%arg0: i32, %arg1: i32) -> (i32, i32, i32) {
    %c0_i32 = arith.constant 0 : i32
    %c0_i32_0 = arith.constant 0 : i32
    %c0_i32_1 = arith.constant 0 : i32
    return %arg1, %c0_i32, %c0_i32_0 : i32, i32, i32
  }
  func.func @transform_4(%arg0: i32, %arg1: i32) -> (i32, i32, i32) {
    %c0_i32 = arith.constant 0 : i32
    %c0_i32_0 = arith.constant 0 : i32
    %c0_i32_1 = arith.constant 0 : i32
    return %arg1, %c0_i32, %c0_i32_0 : i32, i32, i32
  }
  func.func @transform_5(%arg0: i32, %arg1: i32) -> (i32, i32, i32) {
    %c0_i32 = arith.constant 0 : i32
    %c0_i32_0 = arith.constant 0 : i32
    %c0_i32_1 = arith.constant 0 : i32
    return %arg1, %c0_i32, %c0_i32_0 : i32, i32, i32
  }
  func.func @transform_6(%arg0: i32, %arg1: i32) -> (i32, i32, i32) {
    %c0_i32 = arith.constant 0 : i32
    %c0_i32_0 = arith.constant 0 : i32
    %c0_i32_1 = arith.constant 0 : i32
    return %arg1, %c0_i32, %c0_i32_0 : i32, i32, i32
  }
  func.func @transform_7(%arg0: i32, %arg1: i32) -> (i32, i32, i32) {
    %c0_i32 = arith.constant 0 : i32
    %c0_i32_0 = arith.constant 0 : i32
    %c0_i32_1 = arith.constant 0 : i32
    return %arg1, %c0_i32, %c0_i32_0 : i32, i32, i32
  }
  func.func @transform_8(%arg0: i32, %arg1: i32) -> (i32, i32, i32) {
    %c0_i32 = arith.constant 0 : i32
    %c0_i32_0 = arith.constant 0 : i32
    %c0_i32_1 = arith.constant 0 : i32
    return %arg1, %c0_i32, %c0_i32_0 : i32, i32, i32
  }
  func.func @transform_9(%arg0: i32, %arg1: i32) -> (i32, i32, i32) {
    %c0_i32 = arith.constant 0 : i32
    %c0_i32_0 = arith.constant 0 : i32
    %c0_i32_1 = arith.constant 0 : i32
    return %arg1, %c0_i32, %c0_i32_0 : i32, i32, i32
  }
  func.func @transform_10(%arg0: i32, %arg1: i32) -> (i32, i32, i32) {
    %c0_i32 = arith.constant 0 : i32
    %c0_i32_0 = arith.constant 0 : i32
    %c0_i32_1 = arith.constant 0 : i32
    return %arg1, %c0_i32, %c0_i32_0 : i32, i32, i32
  }
  func.func @transform_11(%arg0: i32, %arg1: i32) -> (i32, i32, i32) {
    %c0_i32 = arith.constant 0 : i32
    %c0_i32_0 = arith.constant 0 : i32
    %c0_i32_1 = arith.constant 0 : i32
    return %arg1, %c0_i32, %c0_i32_0 : i32, i32, i32
  }
  func.func @transform_12(%arg0: i32, %arg1: i32) -> (i32, i32, i32) {
    %c0_i32 = arith.constant 0 : i32
    %c0_i32_0 = arith.constant 0 : i32
    %c0_i32_1 = arith.constant 0 : i32
    return %arg1, %c0_i32, %c0_i32_0 : i32, i32, i32
  }
  func.func @transform_13(%arg0: i32, %arg1: i32) -> (i32, i32, i32) {
    %c0_i32 = arith.constant 0 : i32
    %c0_i32_0 = arith.constant 0 : i32
    %c0_i32_1 = arith.constant 0 : i32
    return %arg0, %c0_i32, %c0_i32_0 : i32, i32, i32
  }
}

</mosaic_0001>

<llo_original>
// kernel: transformer_forward.1
$region0: #{transformer_forward.1}
  #allocation0 [shape = 'u32[]', space=smem, size = 0x4, offset = 0x4, fixed_abs, tag = 'smem constant byte address 0x4 - core index']
  #allocation1 [shape = 'u32[144,128]{1,0:T(1,128)}', space=vmem, size = 0x12000, scoped, tag = 'internal scratch']
  %s0 = inlined_call_operand.hbm [shape: f32[2,16,32], index: 0, kind: input, shape index: {}]
  %s1 = inlined_call_operand.vmem [shape: f32[2,32,96], index: 1, kind: input, shape index: {}]
  %s2 = inlined_call_operand.vmem [shape: f32[2,1,96], index: 2, kind: input, shape index: {}]
  %s3 = inlined_call_operand.vmem [shape: f32[2,32,32], index: 3, kind: input, shape index: {}]
  %s4 = inlined_call_operand.hbm [shape: f32[2,1,32], index: 4, kind: input, shape index: {}]
  %s5 = inlined_call_operand.vmem [shape: f32[2,1,32], index: 5, kind: input, shape index: {}]
  %s6 = inlined_call_operand.vmem [shape: f32[2,1,32], index: 6, kind: input, shape index: {}]
  %s7 = inlined_call_operand.vmem [shape: f32[2,32,64], index: 7, kind: input, shape index: {}]
  %s8 = inlined_call_operand.hbm [shape: f32[2,1,64], index: 8, kind: input, shape index: {}]
  %s9 = inlined_call_operand.vmem [shape: f32[2,64,32], index: 9, kind: input, shape index: {}]
  %s10 = inlined_call_operand.hbm [shape: f32[2,1,32], index: 10, kind: input, shape index: {}]
  %s11 = inlined_call_operand.vmem [shape: f32[2,1,32], index: 11, kind: input, shape index: {}]
  %s12 = inlined_call_operand.vmem [shape: f32[2,1,32], index: 12, kind: input, shape index: {}]
  %s13 = inlined_call_operand.hbm [shape: f32[2,16,32], index: 13, kind: output, shape index: {}]
  %s14 = sld [smem:[#allocation0]]
  $region105: #{transformer_forward.1} parent=0
    _
  %s16 = ssub.s32 1, %s14
  %s17 = scalar_select 0, %s16, %s14
  $region1: #{transformer_forward.1} parent=0
    #allocation2 [shape = 'u8[16384]{0}', space=vmem, size = 0x4000, scoped, tag = 'input window, operand 0']
    #allocation3 [shape = 's32[2]{0}', space=sflag, size = 0x8, scoped, tag = 'scoped memory for transformer_forward.1']
    #allocation4 [shape = 's32[2]{0}', space=sflag, size = 0x8, scoped, tag = 'scoped memory for transformer_forward.1']
    #allocation5 [shape = 'u8[1024]{0}', space=vmem, size = 0x400, scoped, tag = 'input window, operand 4']
    #allocation6 [shape = 's32[2]{0}', space=sflag, size = 0x8, scoped, tag = 'scoped memory for transformer_forward.1']
    #allocation7 [shape = 'u8[1024]{0}', space=vmem, size = 0x400, scoped, tag = 'input window, operand 8']
    #allocation8 [shape = 'u8[1024]{0}', space=vmem, size = 0x400, scoped, tag = 'input window, operand 10']
    #allocation9 [shape = 's32[2]{0}', space=sflag, size = 0x8, scoped, tag = 'scoped memory for transformer_forward.1']
    #allocation10 [shape = 'u8[16384]{0}', space=vmem, size = 0x4000, scoped, tag = 'output window, operand 0']
    %18 = vsyncpa [#allocation3], 0
    %s19 = scalar_lea.sflag [#allocation3], 1
    %20 = vsyncpa %s19, 0
    %21 = vsyncpa [#allocation6], 0
    %s22 = scalar_lea.sflag [#allocation6], 1
    %23 = vsyncpa %s22, 0
    %24 = vsyncpa [#allocation9], 0
    %s25 = scalar_lea.sflag [#allocation9], 1
    %26 = vsyncpa %s25, 0
    %27 = vsyncpa [#allocation4], 0
    %s28 = scalar_lea.sflag [#allocation4], 1
    %29 = vsyncpa %s28, 0
    loop: start=0, step=1, limit=6
    $region2: #{transformer_forward.1} parent=1 // loop_pre_header
      _
    $region3: #{transformer_forward.1} parent=1 // loop_header
      %s31 = sphi 0, %s35
      %p32 = scmp.ge.s32.totalorder %s31, 6
      %s38 = sphi 0, %s50
      %s39 = sphi 0, %s46
      %s40 = sphi 0, %s38
      %s41 = sphi 0, %s39
      %s42 = sphi 0, %s40
      %s43 = sphi 0, %s41
      %s53 = sphi 0, %s55
      %s56 = sphi 0, %s53
      %s57 = sphi 0, %s56
      %s73 = sphi 0, %s57
      %s79 = sphi 0, %s81
      %s82 = sphi 0, %s79
      %s83 = sphi 0, %s82
      %s99 = sphi 0, %s83
      %s105 = sphi 0, %s107
      %s108 = sphi 0, %s105
      %s109 = sphi 0, %s108
      %s125 = sphi 0, %s109
      %s131 = sphi 0, %s133
      %s134 = sphi 0, %s131
      %s135 = sphi 0, %s134
      %s151 = sphi 0, %s135
      %s157 = sphi 0, %s159
      %s160 = sphi 0, %s157
      %s161 = sphi 0, %s160
      %s177 = sphi 0, %s161
      %s183 = sphi 0, %s185
      %s186 = sphi 0, %s183
      %s187 = sphi 0, %s186
      %s203 = sphi 0, %s187
      %s209 = sphi 0, %s211
      %s212 = sphi 0, %s209
      %s213 = sphi 0, %s212
      %s229 = sphi 0, %s213
      %s235 = sphi 0, %s237
      %s238 = sphi 0, %s235
      %s239 = sphi 0, %s238
      %s255 = sphi 0, %s239
      %s261 = sphi 0, %s263
      %s264 = sphi 0, %s261
      %s265 = sphi 0, %s264
      %s281 = sphi 0, %s265
      %s287 = sphi 0, %s289
      %s290 = sphi 0, %s287
      %s291 = sphi 0, %s290
      %s307 = sphi 0, %s291
      %s313 = sphi 0, %s315
      %s316 = sphi 0, %s313
      %s317 = sphi 0, %s316
      %s333 = sphi 0, %s317
      %s339 = sphi 0, %s341
      %s342 = sphi 0, %s339
      %s343 = sphi 0, %s342
      %s359 = sphi 0, %s343
      %s365 = sphi 0, %s367
      %s368 = sphi 0, %s365
      %s369 = sphi 0, %s368
      %s385 = sphi 0, %s369
      %s391 = sphi 0, %s393
      %s394 = sphi 0, %s391
      %s395 = sphi 0, %s394
      %s411 = sphi 0, %s395
    $region4: #{transformer_forward.1} parent=1 // loop_header_branch
      %34 = sbr.rel (%p32) target = $region8
    $region5: #{transformer_forward.1} parent=1 // loop_body
      %s36 = ssub.s32 %s31, 1
      %s37 = ssub.s32 %s31, 2
      %s44 = sadd.s32 1, %s39
      %p45 = scmp.ge.s32.totalorder %s44, 2
      %s46 = scalar_select %p45, 0, %s44
      %s47 = sadd.s32 1, %s38
      %s48 = scalar_select %p45, %s47, %s38
      %p49 = scmp.ge.s32.totalorder %s48, 2
      %s50 = scalar_select %p49, 0, %s48
      %s51 = ssub.s32 %s38, %s50
      %p52 = scmp.eq.s32.totalorder %s51, 0
      %s54 = sadd.s32 %s53, 1
      %s55 = scalar_select %p52, %s53, %s54
      %p58 = pneg %p52
      %p59 = scmp.eq.s32.totalorder %s31, 3
      %p60 = por %p58, %p59
      %p61 = scmp.ne.s32.totalorder %s53, %s56
      %p62 = scmp.eq.s32.totalorder %s31, 0
      %p63 = por %p61, %p62
      %p64 = scmp.ne.s32.totalorder %s53, %s56
      %p65 = scmp.eq.s32.totalorder %s36, 3
      %p66 = por %p64, %p65
      %p67 = scmp.ne.s32.totalorder %s56, %s57
      %p68 = scmp.eq.s32.totalorder %s36, 0
      %p69 = por %p67, %p68
      %p70 = scmp.ne.s32.totalorder %s56, %s57
      %p71 = scmp.eq.s32.totalorder %s37, 3
      %p72 = por %p70, %p71
      %p74 = scmp.ne.s32.totalorder %s57, %s73
      %p75 = scmp.eq.s32.totalorder %s37, 0
      %p76 = por %p74, %p75
      %s77 = ssub.s32 %s39, %s46
      %p78 = scmp.eq.s32.totalorder %s77, 0
      %s80 = sadd.s32 %s79, 1
      %s81 = scalar_select %p78, %s79, %s80
      %p84 = pneg %p78
      %p85 = scmp.eq.s32.totalorder %s31, 3
      %p86 = por %p84, %p85
      %p87 = scmp.ne.s32.totalorder %s79, %s82
      %p88 = scmp.eq.s32.totalorder %s31, 0
      %p89 = por %p87, %p88
      %p90 = scmp.ne.s32.totalorder %s79, %s82
      %p91 = scmp.eq.s32.totalorder %s36, 3
      %p92 = por %p90, %p91
      %p93 = scmp.ne.s32.totalorder %s82, %s83
      %p94 = scmp.eq.s32.totalorder %s36, 0
      %p95 = por %p93, %p94
      %p96 = scmp.ne.s32.totalorder %s82, %s83
      %p97 = scmp.eq.s32.totalorder %s37, 3
      %p98 = por %p96, %p97
      %p100 = scmp.ne.s32.totalorder %s83, %s99
      %p101 = scmp.eq.s32.totalorder %s37, 0
      %p102 = por %p100, %p101
      %s103 = ssub.s32 %s39, %s46
      %p104 = scmp.eq.s32.totalorder %s103, 0
      %s106 = sadd.s32 %s105, 1
      %s107 = scalar_select %p104, %s105, %s106
      %p110 = pneg %p104
      %p111 = scmp.eq.s32.totalorder %s31, 3
      %p112 = por %p110, %p111
      %p113 = scmp.ne.s32.totalorder %s105, %s108
      %p114 = scmp.eq.s32.totalorder %s31, 0
      %p115 = por %p113, %p114
      %p116 = scmp.ne.s32.totalorder %s105, %s108
      %p117 = scmp.eq.s32.totalorder %s36, 3
      %p118 = por %p116, %p117
      %p119 = scmp.ne.s32.totalorder %s108, %s109
      %p120 = scmp.eq.s32.totalorder %s36, 0
      %p121 = por %p119, %p120
      %p122 = scmp.ne.s32.totalorder %s108, %s109
      %p123 = scmp.eq.s32.totalorder %s37, 3
      %p124 = por %p122, %p123
      %p126 = scmp.ne.s32.totalorder %s109, %s125
      %p127 = scmp.eq.s32.totalorder %s37, 0
      %p128 = por %p126, %p127
      %s129 = ssub.s32 %s39, %s46
      %p130 = scmp.eq.s32.totalorder %s129, 0
      %s132 = sadd.s32 %s131, 1
      %s133 = scalar_select %p130, %s131, %s132
      %p136 = pneg %p130
      %p137 = scmp.eq.s32.totalorder %s31, 3
      %p138 = por %p136, %p137
      %p139 = scmp.ne.s32.totalorder %s131, %s134
      %p140 = scmp.eq.s32.totalorder %s31, 0
      %p141 = por %p139, %p140
      %p142 = scmp.ne.s32.totalorder %s131, %s134
      %p143 = scmp.eq.s32.totalorder %s36, 3
      %p144 = por %p142, %p143
      %p145 = scmp.ne.s32.totalorder %s134, %s135
      %p146 = scmp.eq.s32.totalorder %s36, 0
      %p147 = por %p145, %p146
      %p148 = scmp.ne.s32.totalorder %s134, %s135
      %p149 = scmp.eq.s32.totalorder %s37, 3
      %p150 = por %p148, %p149
      %p152 = scmp.ne.s32.totalorder %s135, %s151
      %p153 = scmp.eq.s32.totalorder %s37, 0
      %p154 = por %p152, %p153
      %s155 = ssub.s32 %s39, %s46
      %p156 = scmp.eq.s32.totalorder %s155, 0
      %s158 = sadd.s32 %s157, 1
      %s159 = scalar_select %p156, %s157, %s158
      %p162 = pneg %p156
      %p163 = scmp.eq.s32.totalorder %s31, 3
      %p164 = por %p162, %p163
      %p165 = scmp.ne.s32.totalorder %s157, %s160
      %p166 = scmp.eq.s32.totalorder %s31, 0
      %p167 = por %p165, %p166
      %p168 = scmp.ne.s32.totalorder %s157, %s160
      %p169 = scmp.eq.s32.totalorder %s36, 3
      %p170 = por %p168, %p169
      %p171 = scmp.ne.s32.totalorder %s160, %s161
      %p172 = scmp.eq.s32.totalorder %s36, 0
      %p173 = por %p171, %p172
      %p174 = scmp.ne.s32.totalorder %s160, %s161
      %p175 = scmp.eq.s32.totalorder %s37, 3
      %p176 = por %p174, %p175
      %p178 = scmp.ne.s32.totalorder %s161, %s177
      %p179 = scmp.eq.s32.totalorder %s37, 0
      %p180 = por %p178, %p179
      %s181 = ssub.s32 %s39, %s46
      %p182 = scmp.eq.s32.totalorder %s181, 0
      %s184 = sadd.s32 %s183, 1
      %s185 = scalar_select %p182, %s183, %s184
      %p188 = pneg %p182
      %p189 = scmp.eq.s32.totalorder %s31, 3
      %p190 = por %p188, %p189
      %p191 = scmp.ne.s32.totalorder %s183, %s186
      %p192 = scmp.eq.s32.totalorder %s31, 0
      %p193 = por %p191, %p192
      %p194 = scmp.ne.s32.totalorder %s183, %s186
      %p195 = scmp.eq.s32.totalorder %s36, 3
      %p196 = por %p194, %p195
      %p197 = scmp.ne.s32.totalorder %s186, %s187
      %p198 = scmp.eq.s32.totalorder %s36, 0
      %p199 = por %p197, %p198
      %p200 = scmp.ne.s32.totalorder %s186, %s187
      %p201 = scmp.eq.s32.totalorder %s37, 3
      %p202 = por %p200, %p201
      %p204 = scmp.ne.s32.totalorder %s187, %s203
      %p205 = scmp.eq.s32.totalorder %s37, 0
      %p206 = por %p204, %p205
      %s207 = ssub.s32 %s39, %s46
      %p208 = scmp.eq.s32.totalorder %s207, 0
      %s210 = sadd.s32 %s209, 1
      %s211 = scalar_select %p208, %s209, %s210
      %p214 = pneg %p208
      %p215 = scmp.eq.s32.totalorder %s31, 3
      %p216 = por %p214, %p215
      %p217 = scmp.ne.s32.totalorder %s209, %s212
      %p218 = scmp.eq.s32.totalorder %s31, 0
      %p219 = por %p217, %p218
      %p220 = scmp.ne.s32.totalorder %s209, %s212
      %p221 = scmp.eq.s32.totalorder %s36, 3
      %p222 = por %p220, %p221
      %p223 = scmp.ne.s32.totalorder %s212, %s213
      %p224 = scmp.eq.s32.totalorder %s36, 0
      %p225 = por %p223, %p224
      %p226 = scmp.ne.s32.totalorder %s212, %s213
      %p227 = scmp.eq.s32.totalorder %s37, 3
      %p228 = por %p226, %p227
      %p230 = scmp.ne.s32.totalorder %s213, %s229
      %p231 = scmp.eq.s32.totalorder %s37, 0
      %p232 = por %p230, %p231
      %s233 = ssub.s32 %s39, %s46
      %p234 = scmp.eq.s32.totalorder %s233, 0
      %s236 = sadd.s32 %s235, 1
      %s237 = scalar_select %p234, %s235, %s236
      %p240 = pneg %p234
      %p241 = scmp.eq.s32.totalorder %s31, 3
      %p242 = por %p240, %p241
      %p243 = scmp.ne.s32.totalorder %s235, %s238
      %p244 = scmp.eq.s32.totalorder %s31, 0
      %p245 = por %p243, %p244
      %p246 = scmp.ne.s32.totalorder %s235, %s238
      %p247 = scmp.eq.s32.totalorder %s36, 3
      %p248 = por %p246, %p247
      %p249 = scmp.ne.s32.totalorder %s238, %s239
      %p250 = scmp.eq.s32.totalorder %s36, 0
      %p251 = por %p249, %p250
      %p252 = scmp.ne.s32.totalorder %s238, %s239
      %p253 = scmp.eq.s32.totalorder %s37, 3
      %p254 = por %p252, %p253
      %p256 = scmp.ne.s32.totalorder %s239, %s255
      %p257 = scmp.eq.s32.totalorder %s37, 0
      %p258 = por %p256, %p257
      %s259 = ssub.s32 %s39, %s46
      %p260 = scmp.eq.s32.totalorder %s259, 0
      %s262 = sadd.s32 %s261, 1
      %s263 = scalar_select %p260, %s261, %s262
      %p266 = pneg %p260
      %p267 = scmp.eq.s32.totalorder %s31, 3
      %p268 = por %p266, %p267
      %p269 = scmp.ne.s32.totalorder %s261, %s264
      %p270 = scmp.eq.s32.totalorder %s31, 0
      %p271 = por %p269, %p270
      %p272 = scmp.ne.s32.totalorder %s261, %s264
      %p273 = scmp.eq.s32.totalorder %s36, 3
      %p274 = por %p272, %p273
      %p275 = scmp.ne.s32.totalorder %s264, %s265
      %p276 = scmp.eq.s32.totalorder %s36, 0
      %p277 = por %p275, %p276
      %p278 = scmp.ne.s32.totalorder %s264, %s265
      %p279 = scmp.eq.s32.totalorder %s37, 3
      %p280 = por %p278, %p279
      %p282 = scmp.ne.s32.totalorder %s265, %s281
      %p283 = scmp.eq.s32.totalorder %s37, 0
      %p284 = por %p282, %p283
      %s285 = ssub.s32 %s39, %s46
      %p286 = scmp.eq.s32.totalorder %s285, 0
      %s288 = sadd.s32 %s287, 1
      %s289 = scalar_select %p286, %s287, %s288
      %p292 = pneg %p286
      %p293 = scmp.eq.s32.totalorder %s31, 3
      %p294 = por %p292, %p293
      %p295 = scmp.ne.s32.totalorder %s287, %s290
      %p296 = scmp.eq.s32.totalorder %s31, 0
      %p297 = por %p295, %p296
      %p298 = scmp.ne.s32.totalorder %s287, %s290
      %p299 = scmp.eq.s32.totalorder %s36, 3
      %p300 = por %p298, %p299
      %p301 = scmp.ne.s32.totalorder %s290, %s291
      %p302 = scmp.eq.s32.totalorder %s36, 0
      %p303 = por %p301, %p302
      %p304 = scmp.ne.s32.totalorder %s290, %s291
      %p305 = scmp.eq.s32.totalorder %s37, 3
      %p306 = por %p304, %p305
      %p308 = scmp.ne.s32.totalorder %s291, %s307
      %p309 = scmp.eq.s32.totalorder %s37, 0
      %p310 = por %p308, %p309
      %s311 = ssub.s32 %s39, %s46
      %p312 = scmp.eq.s32.totalorder %s311, 0
      %s314 = sadd.s32 %s313, 1
      %s315 = scalar_select %p312, %s313, %s314
      %p318 = pneg %p312
      %p319 = scmp.eq.s32.totalorder %s31, 3
      %p320 = por %p318, %p319
      %p321 = scmp.ne.s32.totalorder %s313, %s316
      %p322 = scmp.eq.s32.totalorder %s31, 0
      %p323 = por %p321, %p322
      %p324 = scmp.ne.s32.totalorder %s313, %s316
      %p325 = scmp.eq.s32.totalorder %s36, 3
      %p326 = por %p324, %p325
      %p327 = scmp.ne.s32.totalorder %s316, %s317
      %p328 = scmp.eq.s32.totalorder %s36, 0
      %p329 = por %p327, %p328
      %p330 = scmp.ne.s32.totalorder %s316, %s317
      %p331 = scmp.eq.s32.totalorder %s37, 3
      %p332 = por %p330, %p331
      %p334 = scmp.ne.s32.totalorder %s317, %s333
      %p335 = scmp.eq.s32.totalorder %s37, 0
      %p336 = por %p334, %p335
      %s337 = ssub.s32 %s39, %s46
      %p338 = scmp.eq.s32.totalorder %s337, 0
      %s340 = sadd.s32 %s339, 1
      %s341 = scalar_select %p338, %s339, %s340
      %p344 = pneg %p338
      %p345 = scmp.eq.s32.totalorder %s31, 3
      %p346 = por %p344, %p345
      %p347 = scmp.ne.s32.totalorder %s339, %s342
      %p348 = scmp.eq.s32.totalorder %s31, 0
      %p349 = por %p347, %p348
      %p350 = scmp.ne.s32.totalorder %s339, %s342
      %p351 = scmp.eq.s32.totalorder %s36, 3
      %p352 = por %p350, %p351
      %p353 = scmp.ne.s32.totalorder %s342, %s343
      %p354 = scmp.eq.s32.totalorder %s36, 0
      %p355 = por %p353, %p354
      %p356 = scmp.ne.s32.totalorder %s342, %s343
      %p357 = scmp.eq.s32.totalorder %s37, 3
      %p358 = por %p356, %p357
      %p360 = scmp.ne.s32.totalorder %s343, %s359
      %p361 = scmp.eq.s32.totalorder %s37, 0
      %p362 = por %p360, %p361
      %s363 = ssub.s32 %s39, %s46
      %p364 = scmp.eq.s32.totalorder %s363, 0
      %s366 = sadd.s32 %s365, 1
      %s367 = scalar_select %p364, %s365, %s366
      %p370 = pneg %p364
      %p371 = scmp.eq.s32.totalorder %s31, 3
      %p372 = por %p370, %p371
      %p373 = scmp.ne.s32.totalorder %s365, %s368
      %p374 = scmp.eq.s32.totalorder %s31, 0
      %p375 = por %p373, %p374
      %p376 = scmp.ne.s32.totalorder %s365, %s368
      %p377 = scmp.eq.s32.totalorder %s36, 3
      %p378 = por %p376, %p377
      %p379 = scmp.ne.s32.totalorder %s368, %s369
      %p380 = scmp.eq.s32.totalorder %s36, 0
      %p381 = por %p379, %p380
      %p382 = scmp.ne.s32.totalorder %s368, %s369
      %p383 = scmp.eq.s32.totalorder %s37, 3
      %p384 = por %p382, %p383
      %p386 = scmp.ne.s32.totalorder %s369, %s385
      %p387 = scmp.eq.s32.totalorder %s37, 0
      %p388 = por %p386, %p387
      %s389 = ssub.s32 %s38, %s50
      %p390 = scmp.eq.s32.totalorder %s389, 0
      %s392 = sadd.s32 %s391, 1
      %s393 = scalar_select %p390, %s391, %s392
      %p396 = pneg %p390
      %p397 = scmp.eq.s32.totalorder %s31, 3
      %p398 = por %p396, %p397
      %p399 = scmp.ne.s32.totalorder %s391, %s394
      %p400 = scmp.eq.s32.totalorder %s31, 0
      %p401 = por %p399, %p400
      %p402 = scmp.ne.s32.totalorder %s391, %s394
      %p403 = scmp.eq.s32.totalorder %s36, 3
      %p404 = por %p402, %p403
      %p405 = scmp.ne.s32.totalorder %s394, %s395
      %p406 = scmp.eq.s32.totalorder %s36, 0
      %p407 = por %p405, %p406
      %p408 = scmp.ne.s32.totalorder %s394, %s395
      %p409 = scmp.eq.s32.totalorder %s37, 3
      %p410 = por %p408, %p409
      %p412 = scmp.ne.s32.totalorder %s395, %s411
      %p413 = scmp.eq.s32.totalorder %s37, 0
      %p414 = por %p412, %p413
      %p415 = scmp.le.s32.totalorder 1, %s31
      %p416 = scmp.lt.s32.totalorder %s31, 5
      %p417 = pnand %p415, %p416
      %p418 = pneg %p417
      // Predicated region
      $region9: #{transformer_forward.1} parent=5 // pred_check
        _
      $region10: #{transformer_forward.1} parent=5 // pred_check_branch
        %420 = sbr.rel (%p417) target = $region12
      $region11: #{transformer_forward.1} parent=5 // pred_region
        %s421 = ssub.s32 %s31, 1
      $region12: #{transformer_forward.1} parent=5 // pred_fallthru
        _
      %p422 = scmp.lt.s32.totalorder %s31, 4
      // Predicated region
      $region13: #{transformer_forward.1} parent=5 // pred_check
        %p423 = pneg %p422
      $region14: #{transformer_forward.1} parent=5 // pred_check_branch
        %425 = sbr.rel (%p423) target = $region16
      $region15: #{transformer_forward.1} parent=5 // pred_region
        // Predicated region
        $region17: #{transformer_forward.1} parent=15 // pred_check
          %p426 = pneg %p63
        $region18: #{transformer_forward.1} parent=15 // pred_check_branch
          %428 = sbr.rel (%p426) target = $region20
        $region19: #{transformer_forward.1} parent=15 // pred_region
          %s429 = sand.u32 %s53, 1
          %s430 = scalar_lea.sflag [#allocation3], %s429
          %s431 = sand.u32 %s53, 1
          %s432 = smul.addr %s431, 16
          %s433 = scalar_lea.vmem [#allocation2], %s432
          %s435 = ssub.s32 256, 256
          %436 = vsyncadd %s430, %s435
          %s437 = smul.addr %s38, 2
          %s438 = smul.addr %s437, 128
          %s439 = scalar_lea.hbm %s0, %s438
          %s440 = sshll.u32 %s433, 4
          %s441 = int_to_ptr.vmem [resolvable:$true] %s440
          %446 = dma.hbm_to_vmem [thread:$0]  %s439, 256, %s441, %s430, 128, 128, 8
        $region20: #{transformer_forward.1} parent=15 // pred_fallthru
          _
        // Predicated region
        $region21: #{transformer_forward.1} parent=15 // pred_check
          %p447 = pneg %p89
        $region22: #{transformer_forward.1} parent=15 // pred_check_branch
          %449 = sbr.rel (%p447) target = $region24
        $region23: #{transformer_forward.1} parent=15 // pred_region
          %p450 = scmp.lt.s32.totalorder %s39, 1
          %s451 = scalar_select %p450, %s39, 1
          %s452 = smul.addr %s451, 4
          %s453 = smul.addr %s452, 8
          %s454 = scalar_lea.vmem %s1, %s453
        $region24: #{transformer_forward.1} parent=15 // pred_fallthru
          _
        // Predicated region
        $region25: #{transformer_forward.1} parent=15 // pred_check
          %p455 = pneg %p115
        $region26: #{transformer_forward.1} parent=15 // pred_check_branch
          %457 = sbr.rel (%p455) target = $region28
        $region27: #{transformer_forward.1} parent=15 // pred_region
          %p458 = scmp.lt.s32.totalorder %s39, 1
          %s459 = scalar_select %p458, %s39, 1
          %s460 = scalar_lea.vmem %s2, %s459
        $region28: #{transformer_forward.1} parent=15 // pred_fallthru
          _
        // Predicated region
        $region29: #{transformer_forward.1} parent=15 // pred_check
          %p461 = pneg %p141
        $region30: #{transformer_forward.1} parent=15 // pred_check_branch
          %463 = sbr.rel (%p461) target = $region32
        $region31: #{transformer_forward.1} parent=15 // pred_region
          %p464 = scmp.lt.s32.totalorder %s39, 1
          %s465 = scalar_select %p464, %s39, 1
          %s466 = smul.addr %s465, 4
          %s467 = smul.addr %s466, 8
          %s468 = scalar_lea.vmem %s3, %s467
        $region32: #{transformer_forward.1} parent=15 // pred_fallthru
          _
        // Predicated region
        $region33: #{transformer_forward.1} parent=15 // pred_check
          %p469 = pneg %p167
        $region34: #{transformer_forward.1} parent=15 // pred_check_branch
          %471 = sbr.rel (%p469) target = $region36
        $region35: #{transformer_forward.1} parent=15 // pred_region
          %s472 = sand.u32 %s31, 1
          %s473 = scalar_lea.sflag [#allocation6], %s472
          %s474 = sand.u32 %s157, 1
          %s475 = scalar_lea.vmem [#allocation5], %s474
          %s477 = ssub.s32 16, 16
          %478 = vsyncadd %s473, %s477
          %s479 = smul.addr %s39, 16
          %s480 = scalar_lea.hbm %s4, %s479
          %s482 = sshll.u32 %s475, 4
          %s483 = int_to_ptr.vmem [resolvable:$true] %s482
          %485 = dma.hbm_to_vmem [thread:$0]  %s480, 16, %s483, %s473
        $region36: #{transformer_forward.1} parent=15 // pred_fallthru
          _
        // Predicated region
        $region37: #{transformer_forward.1} parent=15 // pred_check
          %p486 = pneg %p193
        $region38: #{transformer_forward.1} parent=15 // pred_check_branch
          %488 = sbr.rel (%p486) target = $region40
        $region39: #{transformer_forward.1} parent=15 // pred_region
          %p489 = scmp.lt.s32.totalorder %s39, 1
          %s490 = scalar_select %p489, %s39, 1
          %s491 = scalar_lea.vmem %s5, %s490
        $region40: #{transformer_forward.1} parent=15 // pred_fallthru
          _
        // Predicated region
        $region41: #{transformer_forward.1} parent=15 // pred_check
          %p492 = pneg %p219
        $region42: #{transformer_forward.1} parent=15 // pred_check_branch
          %494 = sbr.rel (%p492) target = $region44
        $region43: #{transformer_forward.1} parent=15 // pred_region
          %p495 = scmp.lt.s32.totalorder %s39, 1
          %s496 = scalar_select %p495, %s39, 1
          %s497 = scalar_lea.vmem %s6, %s496
        $region44: #{transformer_forward.1} parent=15 // pred_fallthru
          _
        // Predicated region
        $region45: #{transformer_forward.1} parent=15 // pred_check
          %p498 = pneg %p245
        $region46: #{transformer_forward.1} parent=15 // pred_check_branch
          %500 = sbr.rel (%p498) target = $region48
        $region47: #{transformer_forward.1} parent=15 // pred_region
          %p501 = scmp.lt.s32.totalorder %s39, 1
          %s502 = scalar_select %p501, %s39, 1
          %s503 = smul.addr %s502, 4
          %s504 = smul.addr %s503, 8
          %s505 = scalar_lea.vmem %s7, %s504
        $region48: #{transformer_forward.1} parent=15 // pred_fallthru
          _
        // Predicated region
        $region49: #{transformer_forward.1} parent=15 // pred_check
          %p506 = pneg %p271
        $region50: #{transformer_forward.1} parent=15 // pred_check_branch
          %508 = sbr.rel (%p506) target = $region52
        $region51: #{transformer_forward.1} parent=15 // pred_region
          %s509 = sand.u32 %s31, 1
          %s510 = scalar_lea.sflag [#allocation6], %s509
          %s511 = sand.u32 %s261, 1
          %s512 = scalar_lea.vmem [#allocation7], %s511
          %s514 = ssub.s32 16, 16
          %515 = vsyncadd %s510, %s514
          %s516 = smul.addr %s39, 16
          %s517 = scalar_lea.hbm %s8, %s516
          %s519 = sshll.u32 %s512, 4
          %s520 = int_to_ptr.vmem [resolvable:$true] %s519
          %522 = dma.hbm_to_vmem [thread:$0]  %s517, 16, %s520, %s510
        $region52: #{transformer_forward.1} parent=15 // pred_fallthru
          _
        // Predicated region
        $region53: #{transformer_forward.1} parent=15 // pred_check
          %p523 = pneg %p297
        $region54: #{transformer_forward.1} parent=15 // pred_check_branch
          %525 = sbr.rel (%p523) target = $region56
        $region55: #{transformer_forward.1} parent=15 // pred_region
          %p526 = scmp.lt.s32.totalorder %s39, 1
          %s527 = scalar_select %p526, %s39, 1
          %s528 = smul.addr %s527, 8
          %s529 = smul.addr %s528, 8
          %s530 = scalar_lea.vmem %s9, %s529
        $region56: #{transformer_forward.1} parent=15 // pred_fallthru
          _
        // Predicated region
        $region57: #{transformer_forward.1} parent=15 // pred_check
          %p531 = pneg %p323
        $region58: #{transformer_forward.1} parent=15 // pred_check_branch
          %533 = sbr.rel (%p531) target = $region60
        $region59: #{transformer_forward.1} parent=15 // pred_region
          %s534 = sand.u32 %s313, 1
          %s535 = scalar_lea.sflag [#allocation9], %s534
          %s536 = sand.u32 %s313, 1
          %s537 = scalar_lea.vmem [#allocation8], %s536
          %s539 = ssub.s32 16, 16
          %540 = vsyncadd %s535, %s539
          %s541 = smul.addr %s39, 16
          %s542 = scalar_lea.hbm %s10, %s541
          %s544 = sshll.u32 %s537, 4
          %s545 = int_to_ptr.vmem [resolvable:$true] %s544
          %547 = dma.hbm_to_vmem [thread:$0]  %s542, 16, %s545, %s535
        $region60: #{transformer_forward.1} parent=15 // pred_fallthru
          _
        // Predicated region
        $region61: #{transformer_forward.1} parent=15 // pred_check
          %p548 = pneg %p349
        $region62: #{transformer_forward.1} parent=15 // pred_check_branch
          %550 = sbr.rel (%p548) target = $region64
        $region63: #{transformer_forward.1} parent=15 // pred_region
          %p551 = scmp.lt.s32.totalorder %s39, 1
          %s552 = scalar_select %p551, %s39, 1
          %s553 = scalar_lea.vmem %s11, %s552
        $region64: #{transformer_forward.1} parent=15 // pred_fallthru
          _
        // Predicated region
        $region65: #{transformer_forward.1} parent=15 // pred_check
          %p554 = pneg %p375
        $region66: #{transformer_forward.1} parent=15 // pred_check_branch
          %556 = sbr.rel (%p554) target = $region68
        $region67: #{transformer_forward.1} parent=15 // pred_region
          %p557 = scmp.lt.s32.totalorder %s39, 1
          %s558 = scalar_select %p557, %s39, 1
          %s559 = scalar_lea.vmem %s12, %s558
        $region68: #{transformer_forward.1} parent=15 // pred_fallthru
          _
      $region16: #{transformer_forward.1} parent=5 // pred_fallthru
        _
      %p560 = scmp.le.s32.totalorder 1, %s31
      %p561 = scmp.lt.s32.totalorder %s31, 5
      %p562 = pnand %p560, %p561
      %p563 = pneg %p562
      // Predicated region
      $region69: #{transformer_forward.1} parent=5 // pred_check
        _
      $region70: #{transformer_forward.1} parent=5 // pred_check_branch
        %565 = sbr.rel (%p562) target = $region72
      $region71: #{transformer_forward.1} parent=5 // pred_region
        %s566 = ssub.s32 %s31, 1
        %s567 = sand.u32 %s56, 1
        %s568 = scalar_lea.sflag [#allocation3], %s567
        %s569 = sand.u32 %s56, 1
        %s570 = smul.addr %s569, 16
        %s571 = scalar_lea.vmem [#allocation2], %s570
        // Predicated region
        $region73: #{transformer_forward.1} parent=71 // pred_check
          %p572 = pneg %p69
        $region74: #{transformer_forward.1} parent=71 // pred_check_branch
          %574 = sbr.rel (%p572) target = $region76
        $region75: #{transformer_forward.1} parent=71 // pred_region
          %575 = dma.done %s568, 256
        $region76: #{transformer_forward.1} parent=71 // pred_fallthru
          _
        %s576 = sand.u32 %s36, 1
        %s577 = scalar_lea.sflag [#allocation6], %s576
        %s578 = sand.u32 %s160, 1
        %s579 = scalar_lea.vmem [#allocation5], %s578
        // Predicated region
        $region77: #{transformer_forward.1} parent=71 // pred_check
          %p580 = pneg %p173
        $region78: #{transformer_forward.1} parent=71 // pred_check_branch
          %582 = sbr.rel (%p580) target = $region80
        $region79: #{transformer_forward.1} parent=71 // pred_region
          %583 = dma.done %s577, 16
        $region80: #{transformer_forward.1} parent=71 // pred_fallthru
          _
        %s584 = sand.u32 %s36, 1
        %s585 = scalar_lea.sflag [#allocation6], %s584
        %s586 = sand.u32 %s264, 1
        %s587 = scalar_lea.vmem [#allocation7], %s586
        // Predicated region
        $region81: #{transformer_forward.1} parent=71 // pred_check
          %p588 = pneg %p277
        $region82: #{transformer_forward.1} parent=71 // pred_check_branch
          %590 = sbr.rel (%p588) target = $region84
        $region83: #{transformer_forward.1} parent=71 // pred_region
          %591 = dma.done %s585, 16
        $region84: #{transformer_forward.1} parent=71 // pred_fallthru
          _
        %s592 = sand.u32 %s316, 1
        %s593 = scalar_lea.sflag [#allocation9], %s592
        %s594 = sand.u32 %s316, 1
        %s595 = scalar_lea.vmem [#allocation8], %s594
        // Predicated region
        $region85: #{transformer_forward.1} parent=71 // pred_check
          %p596 = pneg %p329
        $region86: #{transformer_forward.1} parent=71 // pred_check_branch
          %598 = sbr.rel (%p596) target = $region88
        $region87: #{transformer_forward.1} parent=71 // pred_region
          %599 = dma.done %s593, 16
        $region88: #{transformer_forward.1} parent=71 // pred_fallthru
          _
        %s600 = sand.u32 %s56, 1
        %s601 = scalar_lea.sflag [#allocation3], %s600
        %s602 = sand.u32 %s56, 1
        %s603 = smul.addr %s602, 16
        %s604 = scalar_lea.vmem [#allocation2], %s603
        %p605 = pneg %p69
        %p606 = pneg %p66
        %p607 = scmp.lt.s32.totalorder %s41, 1
        %s608 = scalar_select %p607, %s41, 1
        %s609 = smul.addr %s608, 4
        %s610 = smul.addr %s609, 8
        %s611 = scalar_lea.vmem %s1, %s610
        %p612 = pneg %p95
        %p613 = pneg %p92
        %p614 = scmp.lt.s32.totalorder %s41, 1
        %s615 = scalar_select %p614, %s41, 1
        %s616 = scalar_lea.vmem %s2, %s615
        %p617 = pneg %p121
        %p618 = pneg %p118
        %p619 = scmp.lt.s32.totalorder %s41, 1
        %s620 = scalar_select %p619, %s41, 1
        %s621 = smul.addr %s620, 4
        %s622 = smul.addr %s621, 8
        %s623 = scalar_lea.vmem %s3, %s622
        %p624 = pneg %p147
        %p625 = pneg %p144
        %s626 = sand.u32 %s36, 1
        %s627 = scalar_lea.sflag [#allocation6], %s626
        %s628 = sand.u32 %s160, 1
        %s629 = scalar_lea.vmem [#allocation5], %s628
        %p630 = pneg %p173
        %p631 = pneg %p170
        %p632 = scmp.lt.s32.totalorder %s41, 1
        %s633 = scalar_select %p632, %s41, 1
        %s634 = scalar_lea.vmem %s5, %s633
        %p635 = pneg %p199
        %p636 = pneg %p196
        %p637 = scmp.lt.s32.totalorder %s41, 1
        %s638 = scalar_select %p637, %s41, 1
        %s639 = scalar_lea.vmem %s6, %s638
        %p640 = pneg %p225
        %p641 = pneg %p222
        %p642 = scmp.lt.s32.totalorder %s41, 1
        %s643 = scalar_select %p642, %s41, 1
        %s644 = smul.addr %s643, 4
        %s645 = smul.addr %s644, 8
        %s646 = scalar_lea.vmem %s7, %s645
        %p647 = pneg %p251
        %p648 = pneg %p248
        %s649 = sand.u32 %s36, 1
        %s650 = scalar_lea.sflag [#allocation6], %s649
        %s651 = sand.u32 %s264, 1
        %s652 = scalar_lea.vmem [#allocation7], %s651
        %p653 = pneg %p277
        %p654 = pneg %p274
        %p655 = scmp.lt.s32.totalorder %s41, 1
        %s656 = scalar_select %p655, %s41, 1
        %s657 = smul.addr %s656, 8
        %s658 = smul.addr %s657, 8
        %s659 = scalar_lea.vmem %s9, %s658
        %p660 = pneg %p303
        %p661 = pneg %p300
        %s662 = sand.u32 %s316, 1
        %s663 = scalar_lea.sflag [#allocation9], %s662
        %s664 = sand.u32 %s316, 1
        %s665 = scalar_lea.vmem [#allocation8], %s664
        %p666 = pneg %p329
        %p667 = pneg %p326
        %p668 = scmp.lt.s32.totalorder %s41, 1
        %s669 = scalar_select %p668, %s41, 1
        %s670 = scalar_lea.vmem %s11, %s669
        %p671 = pneg %p355
        %p672 = pneg %p352
        %p673 = scmp.lt.s32.totalorder %s41, 1
        %s674 = scalar_select %p673, %s41, 1
        %s675 = scalar_lea.vmem %s12, %s674
        %p676 = pneg %p381
        %p677 = pneg %p378
        %p678 = pneg %p407
        %p679 = pneg %p404
        %s680 = sand.u32 %s394, 1
        %s681 = scalar_lea.sflag [#allocation4], %s680
        %s682 = sand.u32 %s394, 1
        %s683 = smul.addr %s682, 16
        %s684 = scalar_lea.vmem [#allocation10], %s683
        %p685 = scmp.lt.s32.totalorder %s41, 1
        %s686 = scalar_select %p685, %s41, 1
        %s687 = smul.addr %s686, 4
        %s688 = smul.addr %s687, 8
        %s689 = scalar_lea.vmem %s1, %s688
        %p690 = scmp.lt.s32.totalorder %s41, 1
        %s691 = scalar_select %p690, %s41, 1
        %s692 = scalar_lea.vmem %s2, %s691
        %p693 = scmp.lt.s32.totalorder %s41, 1
        %s694 = scalar_select %p693, %s41, 1
        %s695 = smul.addr %s694, 4
        %s696 = smul.addr %s695, 8
        %s697 = scalar_lea.vmem %s3, %s696
        %p698 = scmp.lt.s32.totalorder %s41, 1
        %s699 = scalar_select %p698, %s41, 1
        %s700 = scalar_lea.vmem %s5, %s699
        %p701 = scmp.lt.s32.totalorder %s41, 1
        %s702 = scalar_select %p701, %s41, 1
        %s703 = scalar_lea.vmem %s6, %s702
        %p704 = scmp.lt.s32.totalorder %s41, 1
        %s705 = scalar_select %p704, %s41, 1
        %s706 = smul.addr %s705, 4
        %s707 = smul.addr %s706, 8
        %s708 = scalar_lea.vmem %s7, %s707
        %p709 = scmp.lt.s32.totalorder %s41, 1
        %s710 = scalar_select %p709, %s41, 1
        %s711 = smul.addr %s710, 8
        %s712 = smul.addr %s711, 8
        %s713 = scalar_lea.vmem %s9, %s712
        %p714 = scmp.lt.s32.totalorder %s41, 1
        %s715 = scalar_select %p714, %s41, 1
        %s716 = scalar_lea.vmem %s11, %s715
        %p717 = scmp.lt.s32.totalorder %s41, 1
        %s718 = scalar_select %p717, %s41, 1
        %s719 = scalar_lea.vmem %s12, %s718
        %p720 = scmp.eq.s32.totalorder %s41, 0
        // Predicated region
        $region89: #{transformer_forward.1} parent=71 // pred_check
          %p721 = pneg %p720
        $region90: #{transformer_forward.1} parent=71 // pred_check_branch
          %723 = sbr.rel (%p721) target = $region92
        $region91: #{transformer_forward.1} parent=71 // pred_region
          %v724 = vld [vmem:[%s571] sm:$0xff]
          %v725 = vld [vmem:[%s571 + $0x8] sm:$0xff]
          %vm726 = vcmask 261120
          %727 = vst.msk [vmem:[%s684] sm:$0xff] %vm726, %v724
          %728 = vst.msk [vmem:[%s684 + $0x8] sm:$0xff] %vm726, %v725
        $region92: #{transformer_forward.1} parent=71 // pred_fallthru
          _
        %v729 = vld [vmem:[%s684] sm:$0xff]
        %v730 = vld [vmem:[%s684 + $0x8] sm:$0xff]
        %v731 = vld [vmem:[%s689] sm:$0xff]
        %v732 = vld [vmem:[%s689 + $0x8] sm:$0xff]
        %v733 = vld [vmem:[%s689 + $0x10] sm:$0xff]
        %v734 = vld [vmem:[%s689 + $0x18] sm:$0xff]
        %v735 = vld [vmem:[%s692] sm:$0x1]
        %v737 = vlaneseq
        %v738 = vshrl.u32 %v737, 7
        %v739 = vsub.s32 0, %v738
        %v740 = vrot.slane %v735, %v739
        %vm742 = vcmask 261120
        %v744 = vsel %vm742, %v729, 0
        %v747 = vsel %vm742, %v730, 0
        %749 = vmatprep.subr.mxu0 0.0
        %750 = vmatpush1.msra.mxu0 0.0
        %751 = vmatprep.subr.mxu0 0.0
        %752 = vmatpush1.msra.mxu0 0.0
        %753 = vmatprep.subr.mxu0 0.0
        %754 = vmatpush1.msra.mxu0 0.0
        %755 = vmatprep.subr.mxu0 0.0
        %756 = vmatpush1.msra.mxu0 0.0
        %757 = vmatprep.subr.mxu0 0.0
        %758 = vmatpush1.msra.mxu0 0.0
        %759 = vmatprep.subr.mxu0 0.0
        %760 = vmatpush1.msra.mxu0 0.0
        %761 = vmatprep.subr.mxu0 0.0
        %762 = vmatpush1.msra.mxu0 0.0
        %763 = vmatprep.subr.mxu0 0.0
        %764 = vmatpush1.msra.mxu0 0.0
        %765 = vmatprep.subr.mxu0 0.0
        %766 = vmatpush1.msra.mxu0 0.0
        %767 = vmatprep.subr.mxu0 0.0
        %768 = vmatpush1.msra.mxu0 0.0
        %769 = vmatprep.subr.mxu0 0.0
        %770 = vmatpush1.msra.mxu0 0.0
        %771 = vmatprep.subr.mxu0 0.0
        %772 = vmatpush1.msra.mxu0 0.0
        %773 = vmatprep.subr.mxu0 0.0
        %774 = vmatpush1.msra.mxu0 %v734
        %775 = vmatprep.subr.mxu0 0.0
        %776 = vmatpush1.msra.mxu0 %v733
        %777 = vmatprep.subr.mxu0 0.0
        %778 = vmatpush1.msra.mxu0 %v732
        %779 = vmatprep.subr.mxu0 0.0
        %780 = vmatpush1.msra.mxu0 %v731
        %781 = vmatprep.subr.mxu0 0.0
        %782 = vmatpush2.msra.mxu0 0.0
        %783 = vmatprep.subr.mxu0 0.0
        %784 = vmatpush2.msra.mxu0 0.0
        %785 = vmatprep.subr.mxu0 0.0
        %786 = vmatpush2.msra.mxu0 0.0
        %787 = vmatprep.subr.mxu0 0.0
        %788 = vmatpush2.msra.mxu0 0.0
        %789 = vmatprep.subr.mxu0 0.0
        %790 = vmatpush2.msra.mxu0 0.0
        %791 = vmatprep.subr.mxu0 0.0
        %792 = vmatpush2.msra.mxu0 0.0
        %793 = vmatprep.subr.mxu0 0.0
        %794 = vmatpush2.msra.mxu0 0.0
        %795 = vmatprep.subr.mxu0 0.0
        %796 = vmatpush2.msra.mxu0 0.0
        %797 = vmatprep.subr.mxu0 0.0
        %798 = vmatpush2.msra.mxu0 0.0
        %799 = vmatprep.subr.mxu0 0.0
        %800 = vmatpush2.msra.mxu0 0.0
        %801 = vmatprep.subr.mxu0 0.0
        %802 = vmatpush2.msra.mxu0 0.0
        %803 = vmatprep.subr.mxu0 0.0
        %804 = vmatpush2.msra.mxu0 0.0
        %805 = vmatprep.subr.mxu0 0.0
        %806 = vmatpush2.msra.mxu0 0.0
        %807 = vmatprep.subr.mxu0 0.0
        %808 = vmatpush2.msra.mxu0 0.0
        %809 = vmatprep.subr.mxu0 0.0
        %810 = vmatpush2.msra.mxu0 0.0
        %811 = vmatprep.subr.mxu0 0.0
        %812 = vmatpush2.msra.mxu0 0.0
        %813 = vmatprep.mubr.f32.mxu0 0.0
        %814 = vmatmul.mubr.f32.gmra.mxu0 %v744
        %v815 = vpop.f32.mrf.mxu0
        %v816 = vadd.f32 %v740, %v815
        %v817 = vpop.f32.mrf.mxu0
        %818 = vmatprep.mubr.f32.mxu0 0.0
        %819 = vmatmul.mubr.f32.gmra.mxu0 %v747
        %v820 = vpop.f32.mrf.mxu0
        %v821 = vadd.f32 %v740, %v820
        %v822 = vpop.f32.mrf.mxu0
        %823 = vdwg.mxu0
        %826 = vrot.lane.b32.xlu0 %v816, 96
        %v827 = vpop.permute.xlu0 %826
        %828 = vrot.lane.b32.xlu0 %v821, 96
        %v829 = vpop.permute.xlu0 %828
        %vm830 = vcmask 130048
        %v831 = vsel %vm830, %v816, 0
        %v833 = vsel %vm830, %v821, 0
        %v835 = vsel %vm830, %v827, 0
        %v837 = vsel %vm830, %v829, 0
        %839 = vmatprep.subr.mxu0 0.0
        %840 = vmatpush1.xpose.msra.mxu0 0.0
        %841 = vmatprep.subr.mxu0 0.0
        %842 = vmatpush1.xpose.msra.mxu0 0.0
        %843 = vmatprep.subr.mxu0 0.0
        %844 = vmatpush1.xpose.msra.mxu0 0.0
        %845 = vmatprep.subr.mxu0 0.0
        %846 = vmatpush1.xpose.msra.mxu0 0.0
        %847 = vmatprep.subr.mxu0 0.0
        %848 = vmatpush1.xpose.msra.mxu0 0.0
        %849 = vmatprep.subr.mxu0 0.0
        %850 = vmatpush1.xpose.msra.mxu0 0.0
        %851 = vmatprep.subr.mxu0 0.0
        %852 = vmatpush1.xpose.msra.mxu0 0.0
        %853 = vmatprep.subr.mxu0 0.0
        %854 = vmatpush1.xpose.msra.mxu0 0.0
        %855 = vmatprep.subr.mxu0 0.0
        %856 = vmatpush1.xpose.msra.mxu0 0.0
        %857 = vmatprep.subr.mxu0 0.0
        %858 = vmatpush1.xpose.msra.mxu0 0.0
        %859 = vmatprep.subr.mxu0 0.0
        %860 = vmatpush1.xpose.msra.mxu0 0.0
        %861 = vmatprep.subr.mxu0 0.0
        %862 = vmatpush1.xpose.msra.mxu0 0.0
        %863 = vmatprep.subr.mxu0 0.0
        %864 = vmatpush1.xpose.msra.mxu0 0.0
        %865 = vmatprep.subr.mxu0 0.0
        %866 = vmatpush1.xpose.msra.mxu0 0.0
        %867 = vmatprep.subr.mxu0 0.0
        %868 = vmatpush1.xpose.msra.mxu0 %v837
        %869 = vmatprep.subr.mxu0 0.0
        %870 = vmatpush1.xpose.msra.mxu0 %v835
        %871 = vmatprep.subr.mxu0 0.0
        %872 = vmatpush2.xpose.msra.mxu0 0.0
        %873 = vmatprep.subr.mxu0 0.0
        %874 = vmatpush2.xpose.msra.mxu0 0.0
        %875 = vmatprep.subr.mxu0 0.0
        %876 = vmatpush2.xpose.msra.mxu0 0.0
        %877 = vmatprep.subr.mxu0 0.0
        %878 = vmatpush2.xpose.msra.mxu0 0.0
        %879 = vmatprep.subr.mxu0 0.0
        %880 = vmatpush2.xpose.msra.mxu0 0.0
        %881 = vmatprep.subr.mxu0 0.0
        %882 = vmatpush2.xpose.msra.mxu0 0.0
        %883 = vmatprep.subr.mxu0 0.0
        %884 = vmatpush2.xpose.msra.mxu0 0.0
        %885 = vmatprep.subr.mxu0 0.0
        %886 = vmatpush2.xpose.msra.mxu0 0.0
        %887 = vmatprep.subr.mxu0 0.0
        %888 = vmatpush2.xpose.msra.mxu0 0.0
        %889 = vmatprep.subr.mxu0 0.0
        %890 = vmatpush2.xpose.msra.mxu0 0.0
        %891 = vmatprep.subr.mxu0 0.0
        %892 = vmatpush2.xpose.msra.mxu0 0.0
        %893 = vmatprep.subr.mxu0 0.0
        %894 = vmatpush2.xpose.msra.mxu0 0.0
        %895 = vmatprep.subr.mxu0 0.0
        %896 = vmatpush2.xpose.msra.mxu0 0.0
        %897 = vmatprep.subr.mxu0 0.0
        %898 = vmatpush2.xpose.msra.mxu0 0.0
        %899 = vmatprep.subr.mxu0 0.0
        %900 = vmatpush2.xpose.msra.mxu0 0.0
        %901 = vmatprep.subr.mxu0 0.0
        %902 = vmatpush2.xpose.msra.mxu0 0.0
        %903 = vmatprep.mubr.f32.mxu0 0.0
        %904 = vmatmul.mubr.f32.gmra.mxu0 %v831
        %v905 = vpop.f32.mrf.mxu0
        %v906 = vadd.f32 0.0, %v905
        %v907 = vpop.f32.mrf.mxu0
        %908 = vmatprep.mubr.f32.mxu0 0.0
        %909 = vmatmul.mubr.f32.gmra.mxu0 %v833
        %v910 = vpop.f32.mrf.mxu0
        %v911 = vadd.f32 0.0, %v910
        %v912 = vpop.f32.mrf.mxu0
        %913 = vdwg.mxu0
        %v914 = vmul.f32 %v906, 0.25
        %v915 = vmul.f32 %v911, 0.25
        %v916 = vsel %vm830, %v914, -inf
        %917 = vmax.xlane.f32.xlu0 %v916
        %v918 = vpop.xlane.xlu0 %917
        %v919 = vsel %vm830, %v915, -inf
        %920 = vmax.xlane.f32.xlu0 %v919
        %v921 = vpop.xlane.xlu0 %920
        %v922 = vsub.f32 %v914, %v918
        %v923 = vsub.f32 %v915, %v921
        %v924 = vmul.f32 %v922, 1.442695
        %v925 = vpow.pop %v924
        %v926 = vmul.f32 %v923, 1.442695
        %v927 = vpow.pop %v926
        %v928 = vsel %vm830, %v925, 0.0
        %929 = vadd.xlane.f32.xlu0 %v928
        %v930 = vpop.xlane.xlu0 %929
        %v931 = vsel %vm830, %v927, 0.0
        %932 = vadd.xlane.f32.xlu0 %v931
        %v933 = vpop.xlane.xlu0 %932
        %v934 = vrcp.pop %v930
        %v935 = vrcp.pop %v933
        %v936 = vmul.f32 %v925, %v934
        %v937 = vmul.f32 %v927, %v935
        %938 = vrot.lane.b32.xlu0 %v816, 64
        %v939 = vpop.permute.xlu0 %938
        %940 = vrot.lane.b32.xlu0 %v821, 64
        %v941 = vpop.permute.xlu0 %940
        %v945 = vsel %vm830, %v936, 0
        %v948 = vsel %vm830, %v937, 0
        %950 = vmatprep.subr.mxu0 0.0
        %951 = vmatpush1.msra.mxu0 0.0
        %952 = vmatprep.subr.mxu0 0.0
        %953 = vmatpush1.msra.mxu0 0.0
        %954 = vmatprep.subr.mxu0 0.0
        %955 = vmatpush1.msra.mxu0 0.0
        %956 = vmatprep.subr.mxu0 0.0
        %957 = vmatpush1.msra.mxu0 0.0
        %958 = vmatprep.subr.mxu0 0.0
        %959 = vmatpush1.msra.mxu0 0.0
        %960 = vmatprep.subr.mxu0 0.0
        %961 = vmatpush1.msra.mxu0 0.0
        %962 = vmatprep.subr.mxu0 0.0
        %963 = vmatpush1.msra.mxu0 0.0
        %964 = vmatprep.subr.mxu0 0.0
        %965 = vmatpush1.msra.mxu0 0.0
        %966 = vmatprep.subr.mxu0 0.0
        %967 = vmatpush1.msra.mxu0 0.0
        %968 = vmatprep.subr.mxu0 0.0
        %969 = vmatpush1.msra.mxu0 0.0
        %970 = vmatprep.subr.mxu0 0.0
        %971 = vmatpush1.msra.mxu0 0.0
        %972 = vmatprep.subr.mxu0 0.0
        %973 = vmatpush1.msra.mxu0 0.0
        %974 = vmatprep.subr.mxu0 0.0
        %975 = vmatpush1.msra.mxu0 0.0
        %976 = vmatprep.subr.mxu0 0.0
        %977 = vmatpush1.msra.mxu0 0.0
        %978 = vmatprep.subr.mxu0 0.0
        %979 = vmatpush1.msra.mxu0 %v941
        %980 = vmatprep.subr.mxu0 0.0
        %981 = vmatpush1.msra.mxu0 %v939
        %982 = vmatprep.subr.mxu0 0.0
        %983 = vmatpush2.msra.mxu0 0.0
        %984 = vmatprep.subr.mxu0 0.0
        %985 = vmatpush2.msra.mxu0 0.0
        %986 = vmatprep.subr.mxu0 0.0
        %987 = vmatpush2.msra.mxu0 0.0
        %988 = vmatprep.subr.mxu0 0.0
        %989 = vmatpush2.msra.mxu0 0.0
        %990 = vmatprep.subr.mxu0 0.0
        %991 = vmatpush2.msra.mxu0 0.0
        %992 = vmatprep.subr.mxu0 0.0
        %993 = vmatpush2.msra.mxu0 0.0
        %994 = vmatprep.subr.mxu0 0.0
        %995 = vmatpush2.msra.mxu0 0.0
        %996 = vmatprep.subr.mxu0 0.0
        %997 = vmatpush2.msra.mxu0 0.0
        %998 = vmatprep.subr.mxu0 0.0
        %999 = vmatpush2.msra.mxu0 0.0
        %1000 = vmatprep.subr.mxu0 0.0
        %1001 = vmatpush2.msra.mxu0 0.0
        %1002 = vmatprep.subr.mxu0 0.0
        %1003 = vmatpush2.msra.mxu0 0.0
        %1004 = vmatprep.subr.mxu0 0.0
        %1005 = vmatpush2.msra.mxu0 0.0
        %1006 = vmatprep.subr.mxu0 0.0
        %1007 = vmatpush2.msra.mxu0 0.0
        %1008 = vmatprep.subr.mxu0 0.0
        %1009 = vmatpush2.msra.mxu0 0.0
        %1010 = vmatprep.subr.mxu0 0.0
        %1011 = vmatpush2.msra.mxu0 0.0
        %1012 = vmatprep.subr.mxu0 0.0
        %1013 = vmatpush2.msra.mxu0 0.0
        %1014 = vmatprep.mubr.f32.mxu0 0.0
        %1015 = vmatmul.mubr.f32.gmra.mxu0 %v945
        %v1016 = vpop.f32.mrf.mxu0
        %v1017 = vadd.f32 0.0, %v1016
        %v1018 = vpop.f32.mrf.mxu0
        %1019 = vmatprep.mubr.f32.mxu0 0.0
        %1020 = vmatmul.mubr.f32.gmra.mxu0 %v948
        %v1021 = vpop.f32.mrf.mxu0
        %v1022 = vadd.f32 0.0, %v1021
        %v1023 = vpop.f32.mrf.mxu0
        %1024 = vdwg.mxu0
        %1025 = vrot.lane.b32.xlu0 %v816, 112
        %v1026 = vpop.permute.xlu0 %1025
        %1027 = vrot.lane.b32.xlu0 %v821, 112
        %v1028 = vpop.permute.xlu0 %1027
        %1029 = vrot.lane.b32.xlu0 %v816, 80
        %v1030 = vpop.permute.xlu0 %1029
        %1031 = vrot.lane.b32.xlu0 %v821, 80
        %v1032 = vpop.permute.xlu0 %1031
        %v1033 = vsel %vm830, %v1026, 0
        %v1035 = vsel %vm830, %v1028, 0
        %v1037 = vsel %vm830, %v1030, 0
        %v1039 = vsel %vm830, %v1032, 0
        %1041 = vmatprep.subr.mxu0 0.0
        %1042 = vmatpush1.xpose.msra.mxu0 0.0
        %1043 = vmatprep.subr.mxu0 0.0
        %1044 = vmatpush1.xpose.msra.mxu0 0.0
        %1045 = vmatprep.subr.mxu0 0.0
        %1046 = vmatpush1.xpose.msra.mxu0 0.0
        %1047 = vmatprep.subr.mxu0 0.0
        %1048 = vmatpush1.xpose.msra.mxu0 0.0
        %1049 = vmatprep.subr.mxu0 0.0
        %1050 = vmatpush1.xpose.msra.mxu0 0.0
        %1051 = vmatprep.subr.mxu0 0.0
        %1052 = vmatpush1.xpose.msra.mxu0 0.0
        %1053 = vmatprep.subr.mxu0 0.0
        %1054 = vmatpush1.xpose.msra.mxu0 0.0
        %1055 = vmatprep.subr.mxu0 0.0
        %1056 = vmatpush1.xpose.msra.mxu0 0.0
        %1057 = vmatprep.subr.mxu0 0.0
        %1058 = vmatpush1.xpose.msra.mxu0 0.0
        %1059 = vmatprep.subr.mxu0 0.0
        %1060 = vmatpush1.xpose.msra.mxu0 0.0
        %1061 = vmatprep.subr.mxu0 0.0
        %1062 = vmatpush1.xpose.msra.mxu0 0.0
        %1063 = vmatprep.subr.mxu0 0.0
        %1064 = vmatpush1.xpose.msra.mxu0 0.0
        %1065 = vmatprep.subr.mxu0 0.0
        %1066 = vmatpush1.xpose.msra.mxu0 0.0
        %1067 = vmatprep.subr.mxu0 0.0
        %1068 = vmatpush1.xpose.msra.mxu0 0.0
        %1069 = vmatprep.subr.mxu0 0.0
        %1070 = vmatpush1.xpose.msra.mxu0 %v1039
        %1071 = vmatprep.subr.mxu0 0.0
        %1072 = vmatpush1.xpose.msra.mxu0 %v1037
        %1073 = vmatprep.subr.mxu0 0.0
        %1074 = vmatpush2.xpose.msra.mxu0 0.0
        %1075 = vmatprep.subr.mxu0 0.0
        %1076 = vmatpush2.xpose.msra.mxu0 0.0
        %1077 = vmatprep.subr.mxu0 0.0
        %1078 = vmatpush2.xpose.msra.mxu0 0.0
        %1079 = vmatprep.subr.mxu0 0.0
        %1080 = vmatpush2.xpose.msra.mxu0 0.0
        %1081 = vmatprep.subr.mxu0 0.0
        %1082 = vmatpush2.xpose.msra.mxu0 0.0
        %1083 = vmatprep.subr.mxu0 0.0
        %1084 = vmatpush2.xpose.msra.mxu0 0.0
        %1085 = vmatprep.subr.mxu0 0.0
        %1086 = vmatpush2.xpose.msra.mxu0 0.0
        %1087 = vmatprep.subr.mxu0 0.0
        %1088 = vmatpush2.xpose.msra.mxu0 0.0
        %1089 = vmatprep.subr.mxu0 0.0
        %1090 = vmatpush2.xpose.msra.mxu0 0.0
        %1091 = vmatprep.subr.mxu0 0.0
        %1092 = vmatpush2.xpose.msra.mxu0 0.0
        %1093 = vmatprep.subr.mxu0 0.0
        %1094 = vmatpush2.xpose.msra.mxu0 0.0
        %1095 = vmatprep.subr.mxu0 0.0
        %1096 = vmatpush2.xpose.msra.mxu0 0.0
        %1097 = vmatprep.subr.mxu0 0.0
        %1098 = vmatpush2.xpose.msra.mxu0 0.0
        %1099 = vmatprep.subr.mxu0 0.0
        %1100 = vmatpush2.xpose.msra.mxu0 0.0
        %1101 = vmatprep.subr.mxu0 0.0
        %1102 = vmatpush2.xpose.msra.mxu0 0.0
        %1103 = vmatprep.subr.mxu0 0.0
        %1104 = vmatpush2.xpose.msra.mxu0 0.0
        %1105 = vmatprep.mubr.f32.mxu0 0.0
        %1106 = vmatmul.mubr.f32.gmra.mxu0 %v1033
        %v1107 = vpop.f32.mrf.mxu0
        %v1108 = vadd.f32 0.0, %v1107
        %v1109 = vpop.f32.mrf.mxu0
        %1110 = vmatprep.mubr.f32.mxu0 0.0
        %1111 = vmatmul.mubr.f32.gmra.mxu0 %v1035
        %v1112 = vpop.f32.mrf.mxu0
        %v1113 = vadd.f32 0.0, %v1112
        %v1114 = vpop.f32.mrf.mxu0
        %1115 = vdwg.mxu0
        %v1116 = vmul.f32 %v1108, 0.25
        %v1117 = vmul.f32 %v1113, 0.25
        %v1118 = vsel %vm830, %v1116, -inf
        %1119 = vmax.xlane.f32.xlu0 %v1118
        %v1120 = vpop.xlane.xlu0 %1119
        %v1121 = vsel %vm830, %v1117, -inf
        %1122 = vmax.xlane.f32.xlu0 %v1121
        %v1123 = vpop.xlane.xlu0 %1122
        %v1124 = vsub.f32 %v1116, %v1120
        %v1125 = vsub.f32 %v1117, %v1123
        %v1126 = vmul.f32 %v1124, 1.442695
        %v1127 = vpow.pop %v1126
        %v1128 = vmul.f32 %v1125, 1.442695
        %v1129 = vpow.pop %v1128
        %v1130 = vsel %vm830, %v1127, 0.0
        %1131 = vadd.xlane.f32.xlu0 %v1130
        %v1132 = vpop.xlane.xlu0 %1131
        %v1133 = vsel %vm830, %v1129, 0.0
        %1134 = vadd.xlane.f32.xlu0 %v1133
        %v1135 = vpop.xlane.xlu0 %1134
        %v1136 = vrcp.pop %v1132
        %v1137 = vrcp.pop %v1135
        %v1138 = vmul.f32 %v1127, %v1136
        %v1139 = vmul.f32 %v1129, %v1137
        %1140 = vrot.lane.b32.xlu0 %v816, 48
        %v1141 = vpop.permute.xlu0 %1140
        %1142 = vrot.lane.b32.xlu0 %v821, 48
        %v1143 = vpop.permute.xlu0 %1142
        %v1147 = vsel %vm830, %v1138, 0
        %v1150 = vsel %vm830, %v1139, 0
        %1152 = vmatprep.subr.mxu0 0.0
        %1153 = vmatpush1.msra.mxu0 0.0
        %1154 = vmatprep.subr.mxu0 0.0
        %1155 = vmatpush1.msra.mxu0 0.0
        %1156 = vmatprep.subr.mxu0 0.0
        %1157 = vmatpush1.msra.mxu0 0.0
        %1158 = vmatprep.subr.mxu0 0.0
        %1159 = vmatpush1.msra.mxu0 0.0
        %1160 = vmatprep.subr.mxu0 0.0
        %1161 = vmatpush1.msra.mxu0 0.0
        %1162 = vmatprep.subr.mxu0 0.0
        %1163 = vmatpush1.msra.mxu0 0.0
        %1164 = vmatprep.subr.mxu0 0.0
        %1165 = vmatpush1.msra.mxu0 0.0
        %1166 = vmatprep.subr.mxu0 0.0
        %1167 = vmatpush1.msra.mxu0 0.0
        %1168 = vmatprep.subr.mxu0 0.0
        %1169 = vmatpush1.msra.mxu0 0.0
        %1170 = vmatprep.subr.mxu0 0.0
        %1171 = vmatpush1.msra.mxu0 0.0
        %1172 = vmatprep.subr.mxu0 0.0
        %1173 = vmatpush1.msra.mxu0 0.0
        %1174 = vmatprep.subr.mxu0 0.0
        %1175 = vmatpush1.msra.mxu0 0.0
        %1176 = vmatprep.subr.mxu0 0.0
        %1177 = vmatpush1.msra.mxu0 0.0
        %1178 = vmatprep.subr.mxu0 0.0
        %1179 = vmatpush1.msra.mxu0 0.0
        %1180 = vmatprep.subr.mxu0 0.0
        %1181 = vmatpush1.msra.mxu0 %v1143
        %1182 = vmatprep.subr.mxu0 0.0
        %1183 = vmatpush1.msra.mxu0 %v1141
        %1184 = vmatprep.subr.mxu0 0.0
        %1185 = vmatpush2.msra.mxu0 0.0
        %1186 = vmatprep.subr.mxu0 0.0
        %1187 = vmatpush2.msra.mxu0 0.0
        %1188 = vmatprep.subr.mxu0 0.0
        %1189 = vmatpush2.msra.mxu0 0.0
        %1190 = vmatprep.subr.mxu0 0.0
        %1191 = vmatpush2.msra.mxu0 0.0
        %1192 = vmatprep.subr.mxu0 0.0
        %1193 = vmatpush2.msra.mxu0 0.0
        %1194 = vmatprep.subr.mxu0 0.0
        %1195 = vmatpush2.msra.mxu0 0.0
        %1196 = vmatprep.subr.mxu0 0.0
        %1197 = vmatpush2.msra.mxu0 0.0
        %1198 = vmatprep.subr.mxu0 0.0
        %1199 = vmatpush2.msra.mxu0 0.0
        %1200 = vmatprep.subr.mxu0 0.0
        %1201 = vmatpush2.msra.mxu0 0.0
        %1202 = vmatprep.subr.mxu0 0.0
        %1203 = vmatpush2.msra.mxu0 0.0
        %1204 = vmatprep.subr.mxu0 0.0
        %1205 = vmatpush2.msra.mxu0 0.0
        %1206 = vmatprep.subr.mxu0 0.0
        %1207 = vmatpush2.msra.mxu0 0.0
        %1208 = vmatprep.subr.mxu0 0.0
        %1209 = vmatpush2.msra.mxu0 0.0
        %1210 = vmatprep.subr.mxu0 0.0
        %1211 = vmatpush2.msra.mxu0 0.0
        %1212 = vmatprep.subr.mxu0 0.0
        %1213 = vmatpush2.msra.mxu0 0.0
        %1214 = vmatprep.subr.mxu0 0.0
        %1215 = vmatpush2.msra.mxu0 0.0
        %1216 = vmatprep.mubr.f32.mxu0 0.0
        %1217 = vmatmul.mubr.f32.gmra.mxu0 %v1147
        %v1218 = vpop.f32.mrf.mxu0
        %v1219 = vadd.f32 0.0, %v1218
        %v1220 = vpop.f32.mrf.mxu0
        %1221 = vmatprep.mubr.f32.mxu0 0.0
        %1222 = vmatmul.mubr.f32.gmra.mxu0 %v1150
        %v1223 = vpop.f32.mrf.mxu0
        %v1224 = vadd.f32 0.0, %v1223
        %v1225 = vpop.f32.mrf.mxu0
        %1226 = vdwg.mxu0
        %1229 = vrot.lane.b32.xlu0 %v1219, 16
        %v1230 = vpop.permute.xlu0 %1229
        %1231 = vrot.lane.b32.xlu0 %v1224, 16
        %v1232 = vpop.permute.xlu0 %1231
        %v1235 = vsel %vm830, %v1017, %v1230
        %v1236 = vsel %vm830, %v1022, %v1232
        %v1237 = vld [vmem:[%s697] sm:$0xff]
        %v1238 = vld [vmem:[%s697 + $0x8] sm:$0xff]
        %v1239 = vld [vmem:[%s697 + $0x10] sm:$0xff]
        %v1240 = vld [vmem:[%s697 + $0x18] sm:$0xff]
        %v1241 = vld [vmem:[%s579] sm:$0x1]
        %v1243 = vlaneseq
        %v1244 = vshrl.u32 %v1243, 7
        %v1245 = vsub.s32 0, %v1244
        %v1246 = vrot.slane %v1241, %v1245
        %v1249 = vsel %vm742, %v1235, 0
        %v1252 = vsel %vm742, %v1236, 0
        %1254 = vmatprep.subr.mxu0 0.0
        %1255 = vmatpush1.msra.mxu0 0.0
        %1256 = vmatprep.subr.mxu0 0.0
        %1257 = vmatpush1.msra.mxu0 0.0
        %1258 = vmatprep.subr.mxu0 0.0
        %1259 = vmatpush1.msra.mxu0 0.0
        %1260 = vmatprep.subr.mxu0 0.0
        %1261 = vmatpush1.msra.mxu0 0.0
        %1262 = vmatprep.subr.mxu0 0.0
        %1263 = vmatpush1.msra.mxu0 0.0
        %1264 = vmatprep.subr.mxu0 0.0
        %1265 = vmatpush1.msra.mxu0 0.0
        %1266 = vmatprep.subr.mxu0 0.0
        %1267 = vmatpush1.msra.mxu0 0.0
        %1268 = vmatprep.subr.mxu0 0.0
        %1269 = vmatpush1.msra.mxu0 0.0
        %1270 = vmatprep.subr.mxu0 0.0
        %1271 = vmatpush1.msra.mxu0 0.0
        %1272 = vmatprep.subr.mxu0 0.0
        %1273 = vmatpush1.msra.mxu0 0.0
        %1274 = vmatprep.subr.mxu0 0.0
        %1275 = vmatpush1.msra.mxu0 0.0
        %1276 = vmatprep.subr.mxu0 0.0
        %1277 = vmatpush1.msra.mxu0 0.0
        %1278 = vmatprep.subr.mxu0 0.0
        %1279 = vmatpush1.msra.mxu0 %v1240
        %1280 = vmatprep.subr.mxu0 0.0
        %1281 = vmatpush1.msra.mxu0 %v1239
        %1282 = vmatprep.subr.mxu0 0.0
        %1283 = vmatpush1.msra.mxu0 %v1238
        %1284 = vmatprep.subr.mxu0 0.0
        %1285 = vmatpush1.msra.mxu0 %v1237
        %1286 = vmatprep.subr.mxu0 0.0
        %1287 = vmatpush2.msra.mxu0 0.0
        %1288 = vmatprep.subr.mxu0 0.0
        %1289 = vmatpush2.msra.mxu0 0.0
        %1290 = vmatprep.subr.mxu0 0.0
        %1291 = vmatpush2.msra.mxu0 0.0
        %1292 = vmatprep.subr.mxu0 0.0
        %1293 = vmatpush2.msra.mxu0 0.0
        %1294 = vmatprep.subr.mxu0 0.0
        %1295 = vmatpush2.msra.mxu0 0.0
        %1296 = vmatprep.subr.mxu0 0.0
        %1297 = vmatpush2.msra.mxu0 0.0
        %1298 = vmatprep.subr.mxu0 0.0
        %1299 = vmatpush2.msra.mxu0 0.0
        %1300 = vmatprep.subr.mxu0 0.0
        %1301 = vmatpush2.msra.mxu0 0.0
        %1302 = vmatprep.subr.mxu0 0.0
        %1303 = vmatpush2.msra.mxu0 0.0
        %1304 = vmatprep.subr.mxu0 0.0
        %1305 = vmatpush2.msra.mxu0 0.0
        %1306 = vmatprep.subr.mxu0 0.0
        %1307 = vmatpush2.msra.mxu0 0.0
        %1308 = vmatprep.subr.mxu0 0.0
        %1309 = vmatpush2.msra.mxu0 0.0
        %1310 = vmatprep.subr.mxu0 0.0
        %1311 = vmatpush2.msra.mxu0 0.0
        %1312 = vmatprep.subr.mxu0 0.0
        %1313 = vmatpush2.msra.mxu0 0.0
        %1314 = vmatprep.subr.mxu0 0.0
        %1315 = vmatpush2.msra.mxu0 0.0
        %1316 = vmatprep.subr.mxu0 0.0
        %1317 = vmatpush2.msra.mxu0 0.0
        %1318 = vmatprep.mubr.f32.mxu0 0.0
        %1319 = vmatmul.mubr.f32.gmra.mxu0 %v1249
        %v1320 = vpop.f32.mrf.mxu0
        %v1321 = vadd.f32 %v1246, %v1320
        %v1322 = vpop.f32.mrf.mxu0
        %1323 = vmatprep.mubr.f32.mxu0 0.0
        %1324 = vmatmul.mubr.f32.gmra.mxu0 %v1252
        %v1325 = vpop.f32.mrf.mxu0
        %v1326 = vadd.f32 %v1246, %v1325
        %v1327 = vpop.f32.mrf.mxu0
        %1328 = vdwg.mxu0
        %v1329 = vld [vmem:[%s700] sm:$0x1]
        %v1330 = vld [vmem:[%s703] sm:$0x1]
        %v1331 = vsel %vm742, %v1321, 0.0
        %1332 = vadd.xlane.f32.xlu0 %v1331
        %v1333 = vpop.xlane.xlu0 %1332
        %v1334 = vsel %vm742, %v1326, 0.0
        %1335 = vadd.xlane.f32.xlu0 %v1334
        %v1336 = vpop.xlane.xlu0 %1335
        %v1337 = vrcp.pop 32.0
        %v1338 = vmul.f32 %v1333, %v1337
        %v1339 = vmul.f32 %v1336, %v1337
        %v1340 = vsub.f32 %v1321, %v1338
        %v1341 = vsub.f32 %v1326, %v1339
        %v1342 = vmul.f32 %v1340, %v1340
        %v1343 = vmul.f32 %v1341, %v1341
        %v1344 = vsel %vm742, %v1342, 0.0
        %1345 = vadd.xlane.f32.xlu0 %v1344
        %v1346 = vpop.xlane.xlu0 %1345
        %v1347 = vsel %vm742, %v1343, 0.0
        %1348 = vadd.xlane.f32.xlu0 %v1347
        %v1349 = vpop.xlane.xlu0 %1348
        %v1350 = vmul.f32 %v1346, %v1337
        %v1351 = vmul.f32 %v1349, %v1337
        %v1352 = vadd.f32 %v1350, 1e-05
        %v1353 = vadd.f32 %v1351, 1e-05
        %v1354 = vrsqrt.pop %v1352
        %v1355 = vrsqrt.pop %v1353
        %v1356 = vmul.f32 %v1340, %v1354
        %v1357 = vmul.f32 %v1341, %v1355
        %v1359 = vlaneseq
        %v1360 = vshrl.u32 %v1359, 7
        %v1361 = vsub.s32 0, %v1360
        %v1362 = vrot.slane %v1329, %v1361
        %v1364 = vmul.f32 %v1356, %v1362
        %v1365 = vmul.f32 %v1357, %v1362
        %v1367 = vlaneseq
        %v1368 = vshrl.u32 %v1367, 7
        %v1369 = vsub.s32 0, %v1368
        %v1370 = vrot.slane %v1330, %v1369
        %v1372 = vadd.f32 %v1364, %v1370
        %v1373 = vadd.f32 %v1365, %v1370
        %v1374 = vadd.f32 %v729, %v1372
        %v1375 = vadd.f32 %v730, %v1373
        %v1376 = vld [vmem:[%s708] sm:$0xff]
        %v1377 = vld [vmem:[%s708 + $0x8] sm:$0xff]
        %v1378 = vld [vmem:[%s708 + $0x10] sm:$0xff]
        %v1379 = vld [vmem:[%s708 + $0x18] sm:$0xff]
        %v1380 = vld [vmem:[%s587] sm:$0x1]
        %v1382 = vlaneseq
        %v1383 = vshrl.u32 %v1382, 7
        %v1384 = vsub.s32 0, %v1383
        %v1385 = vrot.slane %v1380, %v1384
        %v1388 = vsel %vm742, %v1374, 0
        %v1391 = vsel %vm742, %v1375, 0
        %1393 = vmatprep.subr.mxu0 0.0
        %1394 = vmatpush1.msra.mxu0 0.0
        %1395 = vmatprep.subr.mxu0 0.0
        %1396 = vmatpush1.msra.mxu0 0.0
        %1397 = vmatprep.subr.mxu0 0.0
        %1398 = vmatpush1.msra.mxu0 0.0
        %1399 = vmatprep.subr.mxu0 0.0
        %1400 = vmatpush1.msra.mxu0 0.0
        %1401 = vmatprep.subr.mxu0 0.0
        %1402 = vmatpush1.msra.mxu0 0.0
        %1403 = vmatprep.subr.mxu0 0.0
        %1404 = vmatpush1.msra.mxu0 0.0
        %1405 = vmatprep.subr.mxu0 0.0
        %1406 = vmatpush1.msra.mxu0 0.0
        %1407 = vmatprep.subr.mxu0 0.0
        %1408 = vmatpush1.msra.mxu0 0.0
        %1409 = vmatprep.subr.mxu0 0.0
        %1410 = vmatpush1.msra.mxu0 0.0
        %1411 = vmatprep.subr.mxu0 0.0
        %1412 = vmatpush1.msra.mxu0 0.0
        %1413 = vmatprep.subr.mxu0 0.0
        %1414 = vmatpush1.msra.mxu0 0.0
        %1415 = vmatprep.subr.mxu0 0.0
        %1416 = vmatpush1.msra.mxu0 0.0
        %1417 = vmatprep.subr.mxu0 0.0
        %1418 = vmatpush1.msra.mxu0 %v1379
        %1419 = vmatprep.subr.mxu0 0.0
        %1420 = vmatpush1.msra.mxu0 %v1378
        %1421 = vmatprep.subr.mxu0 0.0
        %1422 = vmatpush1.msra.mxu0 %v1377
        %1423 = vmatprep.subr.mxu0 0.0
        %1424 = vmatpush1.msra.mxu0 %v1376
        %1425 = vmatprep.subr.mxu0 0.0
        %1426 = vmatpush2.msra.mxu0 0.0
        %1427 = vmatprep.subr.mxu0 0.0
        %1428 = vmatpush2.msra.mxu0 0.0
        %1429 = vmatprep.subr.mxu0 0.0
        %1430 = vmatpush2.msra.mxu0 0.0
        %1431 = vmatprep.subr.mxu0 0.0
        %1432 = vmatpush2.msra.mxu0 0.0
        %1433 = vmatprep.subr.mxu0 0.0
        %1434 = vmatpush2.msra.mxu0 0.0
        %1435 = vmatprep.subr.mxu0 0.0
        %1436 = vmatpush2.msra.mxu0 0.0
        %1437 = vmatprep.subr.mxu0 0.0
        %1438 = vmatpush2.msra.mxu0 0.0
        %1439 = vmatprep.subr.mxu0 0.0
        %1440 = vmatpush2.msra.mxu0 0.0
        %1441 = vmatprep.subr.mxu0 0.0
        %1442 = vmatpush2.msra.mxu0 0.0
        %1443 = vmatprep.subr.mxu0 0.0
        %1444 = vmatpush2.msra.mxu0 0.0
        %1445 = vmatprep.subr.mxu0 0.0
        %1446 = vmatpush2.msra.mxu0 0.0
        %1447 = vmatprep.subr.mxu0 0.0
        %1448 = vmatpush2.msra.mxu0 0.0
        %1449 = vmatprep.subr.mxu0 0.0
        %1450 = vmatpush2.msra.mxu0 0.0
        %1451 = vmatprep.subr.mxu0 0.0
        %1452 = vmatpush2.msra.mxu0 0.0
        %1453 = vmatprep.subr.mxu0 0.0
        %1454 = vmatpush2.msra.mxu0 0.0
        %1455 = vmatprep.subr.mxu0 0.0
        %1456 = vmatpush2.msra.mxu0 0.0
        %1457 = vmatprep.mubr.f32.mxu0 0.0
        %1458 = vmatmul.mubr.f32.gmra.mxu0 %v1388
        %v1459 = vpop.f32.mrf.mxu0
        %v1460 = vadd.f32 %v1385, %v1459
        %v1461 = vpop.f32.mrf.mxu0
        %1462 = vmatprep.mubr.f32.mxu0 0.0
        %1463 = vmatmul.mubr.f32.gmra.mxu0 %v1391
        %v1464 = vpop.f32.mrf.mxu0
        %v1465 = vadd.f32 %v1385, %v1464
        %v1466 = vpop.f32.mrf.mxu0
        %1467 = vdwg.mxu0
        %v1468 = vmul.f32 %v1460, 0.5
        %v1469 = vmul.f32 %v1465, 0.5
        %v1470 = vmul.f32 %v1460, 0.70710677
        %v1471 = vmul.f32 %v1465, 0.70710677
        %vm1472 = vcmp.ge.f32.partialorder %v1470, 0.0
        %vm1473 = vcmp.ge.f32.partialorder %v1471, 0.0
        %v1474 = vsel %vm1472, 1.0, -1.0
        %v1475 = vsel %vm1473, 1.0, -1.0
        %v1476 = vand.u32 2147483647, %v1470
        %v1477 = vand.u32 2147483647, %v1471
        %v1478 = vmul.f32 %v1476, 0.3275911
        %v1479 = vmul.f32 %v1477, 0.3275911
        %v1480 = vadd.f32 %v1478, 1.0
        %v1481 = vadd.f32 %v1479, 1.0
        %v1482 = vrcp.pop %v1480
        %v1483 = vmul.f32 1.0, %v1482
        %v1484 = vrcp.pop %v1481
        %v1485 = vmul.f32 1.0, %v1484
        %v1486 = vmul.f32 %v1483, 1.0614054
        %v1487 = vmul.f32 %v1485, 1.0614054
        %v1488 = vadd.f32 %v1486, -1.4531521
        %v1489 = vadd.f32 %v1487, -1.4531521
        %v1490 = vmul.f32 %v1483, %v1488
        %v1491 = vmul.f32 %v1485, %v1489
        %v1492 = vadd.f32 %v1490, 1.4214138
        %v1493 = vadd.f32 %v1491, 1.4214138
        %v1494 = vmul.f32 %v1483, %v1492
        %v1495 = vmul.f32 %v1485, %v1493
        %v1496 = vadd.f32 %v1494, -0.28449672
        %v1497 = vadd.f32 %v1495, -0.28449672
        %v1498 = vmul.f32 %v1483, %v1496
        %v1499 = vmul.f32 %v1485, %v1497
        %v1500 = vadd.f32 %v1498, 0.2548296
        %v1501 = vadd.f32 %v1499, 0.2548296
        %v1502 = vmul.f32 %v1483, %v1500
        %v1503 = vmul.f32 %v1485, %v1501
        %v1504 = vsub.f32 0.0, %v1476
        %v1505 = vsub.f32 0.0, %v1477
        %v1506 = vmul.f32 %v1504, %v1476
        %v1507 = vmul.f32 %v1505, %v1477
        %v1508 = vmul.f32 %v1506, 1.442695
        %v1509 = vpow.pop %v1508
        %v1510 = vmul.f32 %v1507, 1.442695
        %v1511 = vpow.pop %v1510
        %v1512 = vmul.f32 %v1502, %v1509
        %v1513 = vmul.f32 %v1503, %v1511
        %v1514 = vsub.f32 1.0, %v1512
        %v1515 = vsub.f32 1.0, %v1513
        %v1516 = vmul.f32 %v1474, %v1514
        %v1517 = vmul.f32 %v1475, %v1515
        %v1518 = vadd.f32 %v1516, 1.0
        %v1519 = vadd.f32 %v1517, 1.0
        %v1520 = vmul.f32 %v1468, %v1518
        %v1521 = vmul.f32 %v1469, %v1519
        %v1522 = vld [vmem:[%s713] sm:$0xff]
        %v1523 = vld [vmem:[%s713 + $0x8] sm:$0xff]
        %v1524 = vld [vmem:[%s713 + $0x10] sm:$0xff]
        %v1525 = vld [vmem:[%s713 + $0x18] sm:$0xff]
        %v1526 = vld [vmem:[%s713 + $0x20] sm:$0xff]
        %v1527 = vld [vmem:[%s713 + $0x28] sm:$0xff]
        %v1528 = vld [vmem:[%s713 + $0x30] sm:$0xff]
        %v1529 = vld [vmem:[%s713 + $0x38] sm:$0xff]
        %v1530 = vld [vmem:[%s595] sm:$0x1]
        %v1532 = vlaneseq
        %v1533 = vshrl.u32 %v1532, 7
        %v1534 = vsub.s32 0, %v1533
        %v1535 = vrot.slane %v1530, %v1534
        %vm1537 = vcmask 523264
        %v1539 = vsel %vm1537, %v1520, 0
        %v1542 = vsel %vm1537, %v1521, 0
        %1544 = vmatprep.subr.mxu0 0.0
        %1545 = vmatpush1.msra.mxu0 0.0
        %1546 = vmatprep.subr.mxu0 0.0
        %1547 = vmatpush1.msra.mxu0 0.0
        %1548 = vmatprep.subr.mxu0 0.0
        %1549 = vmatpush1.msra.mxu0 0.0
        %1550 = vmatprep.subr.mxu0 0.0
        %1551 = vmatpush1.msra.mxu0 0.0
        %1552 = vmatprep.subr.mxu0 0.0
        %1553 = vmatpush1.msra.mxu0 0.0
        %1554 = vmatprep.subr.mxu0 0.0
        %1555 = vmatpush1.msra.mxu0 0.0
        %1556 = vmatprep.subr.mxu0 0.0
        %1557 = vmatpush1.msra.mxu0 0.0
        %1558 = vmatprep.subr.mxu0 0.0
        %1559 = vmatpush1.msra.mxu0 0.0
        %1560 = vmatprep.subr.mxu0 0.0
        %1561 = vmatpush1.msra.mxu0 %v1529
        %1562 = vmatprep.subr.mxu0 0.0
        %1563 = vmatpush1.msra.mxu0 %v1528
        %1564 = vmatprep.subr.mxu0 0.0
        %1565 = vmatpush1.msra.mxu0 %v1527
        %1566 = vmatprep.subr.mxu0 0.0
        %1567 = vmatpush1.msra.mxu0 %v1526
        %1568 = vmatprep.subr.mxu0 0.0
        %1569 = vmatpush1.msra.mxu0 %v1525
        %1570 = vmatprep.subr.mxu0 0.0
        %1571 = vmatpush1.msra.mxu0 %v1524
        %1572 = vmatprep.subr.mxu0 0.0
        %1573 = vmatpush1.msra.mxu0 %v1523
        %1574 = vmatprep.subr.mxu0 0.0
        %1575 = vmatpush1.msra.mxu0 %v1522
        %1576 = vmatprep.subr.mxu0 0.0
        %1577 = vmatpush2.msra.mxu0 0.0
        %1578 = vmatprep.subr.mxu0 0.0
        %1579 = vmatpush2.msra.mxu0 0.0
        %1580 = vmatprep.subr.mxu0 0.0
        %1581 = vmatpush2.msra.mxu0 0.0
        %1582 = vmatprep.subr.mxu0 0.0
        %1583 = vmatpush2.msra.mxu0 0.0
        %1584 = vmatprep.subr.mxu0 0.0
        %1585 = vmatpush2.msra.mxu0 0.0
        %1586 = vmatprep.subr.mxu0 0.0
        %1587 = vmatpush2.msra.mxu0 0.0
        %1588 = vmatprep.subr.mxu0 0.0
        %1589 = vmatpush2.msra.mxu0 0.0
        %1590 = vmatprep.subr.mxu0 0.0
        %1591 = vmatpush2.msra.mxu0 0.0
        %1592 = vmatprep.subr.mxu0 0.0
        %1593 = vmatpush2.msra.mxu0 0.0
        %1594 = vmatprep.subr.mxu0 0.0
        %1595 = vmatpush2.msra.mxu0 0.0
        %1596 = vmatprep.subr.mxu0 0.0
        %1597 = vmatpush2.msra.mxu0 0.0
        %1598 = vmatprep.subr.mxu0 0.0
        %1599 = vmatpush2.msra.mxu0 0.0
        %1600 = vmatprep.subr.mxu0 0.0
        %1601 = vmatpush2.msra.mxu0 0.0
        %1602 = vmatprep.subr.mxu0 0.0
        %1603 = vmatpush2.msra.mxu0 0.0
        %1604 = vmatprep.subr.mxu0 0.0
        %1605 = vmatpush2.msra.mxu0 0.0
        %1606 = vmatprep.subr.mxu0 0.0
        %1607 = vmatpush2.msra.mxu0 0.0
        %1608 = vmatprep.mubr.f32.mxu0 0.0
        %1609 = vmatmul.mubr.f32.gmra.mxu0 %v1539
        %v1610 = vpop.f32.mrf.mxu0
        %v1611 = vadd.f32 %v1535, %v1610
        %v1612 = vpop.f32.mrf.mxu0
        %1613 = vmatprep.mubr.f32.mxu0 0.0
        %1614 = vmatmul.mubr.f32.gmra.mxu0 %v1542
        %v1615 = vpop.f32.mrf.mxu0
        %v1616 = vadd.f32 %v1535, %v1615
        %v1617 = vpop.f32.mrf.mxu0
        %1618 = vdwg.mxu0
        %v1619 = vld [vmem:[%s716] sm:$0x1]
        %v1620 = vld [vmem:[%s719] sm:$0x1]
        %v1621 = vsel %vm742, %v1611, 0.0
        %1622 = vadd.xlane.f32.xlu0 %v1621
        %v1623 = vpop.xlane.xlu0 %1622
        %v1624 = vsel %vm742, %v1616, 0.0
        %1625 = vadd.xlane.f32.xlu0 %v1624
        %v1626 = vpop.xlane.xlu0 %1625
        %v1627 = vmul.f32 %v1623, %v1337
        %v1628 = vmul.f32 %v1626, %v1337
        %v1629 = vsub.f32 %v1611, %v1627
        %v1630 = vsub.f32 %v1616, %v1628
        %v1631 = vmul.f32 %v1629, %v1629
        %v1632 = vmul.f32 %v1630, %v1630
        %v1633 = vsel %vm742, %v1631, 0.0
        %1634 = vadd.xlane.f32.xlu0 %v1633
        %v1635 = vpop.xlane.xlu0 %1634
        %v1636 = vsel %vm742, %v1632, 0.0
        %1637 = vadd.xlane.f32.xlu0 %v1636
        %v1638 = vpop.xlane.xlu0 %1637
        %v1639 = vmul.f32 %v1635, %v1337
        %v1640 = vmul.f32 %v1638, %v1337
        %v1641 = vadd.f32 %v1639, 1e-05
        %v1642 = vadd.f32 %v1640, 1e-05
        %v1643 = vrsqrt.pop %v1641
        %v1644 = vrsqrt.pop %v1642
        %v1645 = vmul.f32 %v1629, %v1643
        %v1646 = vmul.f32 %v1630, %v1644
        %v1648 = vlaneseq
        %v1649 = vshrl.u32 %v1648, 7
        %v1650 = vsub.s32 0, %v1649
        %v1651 = vrot.slane %v1619, %v1650
        %v1653 = vmul.f32 %v1645, %v1651
        %v1654 = vmul.f32 %v1646, %v1651
        %v1656 = vlaneseq
        %v1657 = vshrl.u32 %v1656, 7
        %v1658 = vsub.s32 0, %v1657
        %v1659 = vrot.slane %v1620, %v1658
        %v1661 = vadd.f32 %v1653, %v1659
        %v1662 = vadd.f32 %v1654, %v1659
        %v1663 = vadd.f32 %v1374, %v1661
        %v1664 = vadd.f32 %v1375, %v1662
        %1665 = vst.msk [vmem:[%s684] sm:$0xff] %vm742, %v1663
        %1666 = vst.msk [vmem:[%s684 + $0x8] sm:$0xff] %vm742, %v1664
        %s1667 = sand.u32 %s394, 1
        %s1668 = scalar_lea.sflag [#allocation4], %s1667
        %s1669 = sand.u32 %s394, 1
        %s1670 = smul.addr %s1669, 16
        %s1671 = scalar_lea.vmem [#allocation10], %s1670
        // Predicated region
        $region93: #{transformer_forward.1} parent=71 // pred_check
          %p1672 = pneg %p404
        $region94: #{transformer_forward.1} parent=71 // pred_check_branch
          %1674 = sbr.rel (%p1672) target = $region96
        $region95: #{transformer_forward.1} parent=71 // pred_region
          %s1676 = ssub.s32 256, 256
          %1677 = vsyncadd %s1668, %s1676
          %s1678 = smul.addr %s40, 2
          %s1679 = smul.addr %s1678, 128
          %s1680 = scalar_lea.hbm %s13, %s1679
          %s1681 = sshll.u32 %s1671, 4
          %s1682 = int_to_ptr.vmem [resolvable:$true] %s1681
          %1687 = dma.vmem_to_hbm [thread:$0]  %s1682, 256, %s1680, %s1668, 128, 128, 8
        $region96: #{transformer_forward.1} parent=71 // pred_fallthru
          _
      $region72: #{transformer_forward.1} parent=5 // pred_fallthru
        _
      %p1688 = scmp.le.s32.totalorder 2, %s31
      // Predicated region
      $region97: #{transformer_forward.1} parent=5 // pred_check
        %p1689 = pneg %p1688
      $region98: #{transformer_forward.1} parent=5 // pred_check_branch
        %1691 = sbr.rel (%p1689) target = $region100
      $region99: #{transformer_forward.1} parent=5 // pred_region
        %s1692 = ssub.s32 %s31, 2
        // Predicated region
        $region101: #{transformer_forward.1} parent=99 // pred_check
          %p1693 = pneg %p410
        $region102: #{transformer_forward.1} parent=99 // pred_check_branch
          %1695 = sbr.rel (%p1693) target = $region104
        $region103: #{transformer_forward.1} parent=99 // pred_region
          %s1696 = sand.u32 %s395, 1
          %s1697 = scalar_lea.sflag [#allocation4], %s1696
          %s1698 = sand.u32 %s395, 1
          %s1699 = smul.addr %s1698, 16
          %s1700 = scalar_lea.vmem [#allocation10], %s1699
          %1701 = dma.done %s1697, 256
        $region104: #{transformer_forward.1} parent=99 // pred_fallthru
          _
      $region100: #{transformer_forward.1} parent=5 // pred_fallthru
        _
    $region6: #{transformer_forward.1} parent=1 // loop_footer
      %s35 = sadd.s32 1, %s31
    $region7: #{transformer_forward.1} parent=1 // loop_footer_branch
      %30 = sbr.rel target = $region3
    $region8: #{transformer_forward.1} parent=1 // loop_exit
      _
    %1702 = vsyncpa [#allocation3], 1
    %s1703 = scalar_lea.sflag [#allocation3], 1
    %1704 = vsyncpa %s1703, 1
    %1705 = vsyncpa [#allocation6], 1
    %s1706 = scalar_lea.sflag [#allocation6], 1
    %1707 = vsyncpa %s1706, 1
    %1708 = vsyncpa [#allocation9], 1
    %s1709 = scalar_lea.sflag [#allocation9], 1
    %1710 = vsyncpa %s1709, 1
    %1711 = vsyncpa [#allocation4], 1
    %s1712 = scalar_lea.sflag [#allocation4], 1
    %1713 = vsyncpa %s1712, 1

</llo_original>
